<compile_context>
chip_gen: v7x
topology: tpu7x:2x2x1
jax: 0.10.0
libtpu: 0.0.40
codegen_flags: <defaults>
</compile_context>

<pallas_src>
import jax
import jax.numpy as jnp
from jax.experimental import pallas as pl
from jax.experimental.pallas import tpu as pltpu


def _sigmoid(x):
    # Numerically stable, division-free sigmoid: 0.5 * (1 + tanh(x/2)) (EUP tanh).
    return 0.5 * (jnp.tanh(0.5 * x) + 1.0)


def _lstm_gates(g, c_prev, H):
    """torch.nn.LSTMCell update from pre-activation gates g = [i|f|g|o]."""
    i = _sigmoid(g[:, 0 * H:1 * H])
    f = _sigmoid(g[:, 1 * H:2 * H])
    gg = jnp.tanh(g[:, 2 * H:3 * H])
    o = _sigmoid(g[:, 3 * H:4 * H])
    c_new = f * c_prev + i * gg
    h_new = o * jnp.tanh(c_new)
    return h_new, c_new


def _topdown_decoder_kernel(
    # inputs (all fully VMEM-resident; no grid)
    x1p_ref,    # [T, B, 4H] f32  : dropout(relu(embed(w))) @ W1_x   (hoisted)
    mdrop_ref,  # [T, B, H]  bf16 : inverted-dropout mask for h2
    v_ref,      # [B, N, H]  f32
    vv_ref,     # [B, N, H]  f32  : w_v(v) = v @ Wv + bv             (hoisted)
    vm1_ref,    # [B, 4H]    f32  : v_mean @ W1_vm + b1              (hoisted)
    w1r_ref,    # [2H, 4H]   bf16 : concat([u1, w1_h2]) rows match [h1|h2]
    wg_ref,     # [H, H]     bf16
    bg_ref,     # [1, H]     f32
    wh_ref,     # [1, H]     f32
    bh_ref,     # [1, 1]     f32
    w2r_ref,    # [3H, 4H]   bf16 : concat([w2_av, w2_h1, u2]) rows match [av|h1|h2]
    b2_ref,     # [1, 4H]    f32
    wm_ref,     # [H, V]     bf16
    bm_ref,     # [1, V]     f32
    # output
    out_ref,    # [T, B, V]  f32
    # scratch
    hh_s,       # [B, 3H] f32 : recurrent activations  [alpha_v | h1 | h2]
    c1_s,       # [B, H]  f32
    c2_s,       # [B, H]  f32
):
    T = x1p_ref.shape[0]
    B, N, H = v_ref.shape
    f32 = jnp.float32
    bf16 = jnp.bfloat16

    # zero-init recurrent state (h_c1 = h_c2 = 0 as in the torch decoder)
    hh_s[...] = jnp.zeros((B, 3 * H), f32)
    c1_s[...] = jnp.zeros((B, H), f32)
    c2_s[...] = jnp.zeros((B, H), f32)

    def step(t, carry):
        x1p = x1p_ref[t]                        # [B, 4H]
        drop2 = mdrop_ref[t].astype(f32)        # [B, H]
        c1 = c1_s[...]
        c2 = c2_s[...]

        # ---- attention LSTM: one fused dot [h1|h2] @ [u1;w1_h2] + hoisted terms
        g1 = (jnp.dot(hh_s[:, H:3 * H].astype(bf16), w1r_ref[...],
                      preferred_element_type=f32)
              + vm1_ref[...] + x1p)
        h1, c1n = _lstm_gates(g1, c1, H)
        hh_s[:, H:2 * H] = h1
        c1_s[...] = c1n

        # ---- soft attention over the N region features ----
        wg_h = (jnp.dot(h1.astype(bf16), wg_ref[...],
                        preferred_element_type=f32) + bg_ref[...])   # [B, H]
        z = jnp.tanh(vv_ref[...] + wg_h[:, None, :])                 # [B, N, H]
        alpha = jnp.sum(z * wh_ref[...], axis=-1) + bh_ref[...]      # [B, N]
        alpha = alpha - jnp.max(alpha, axis=-1, keepdims=True)
        e = jnp.exp(alpha)
        att = e * pl.reciprocal(jnp.sum(e, axis=-1, keepdims=True), approx=True)
        alpha_v = jnp.sum(att[:, :, None] * v_ref[...], axis=1)      # [B, H]
        hh_s[:, 0:H] = alpha_v

        # ---- language LSTM: one fused dot [alpha_v|h1|h2_prev] @ [w2_av;w2_h1;u2]
        g2 = (jnp.dot(hh_s[...].astype(bf16), w2r_ref[...],
                      preferred_element_type=f32) + b2_ref[...])
        h2, c2n = _lstm_gates(g2, c2, H)
        hh_s[:, 2 * H:3 * H] = h2
        c2_s[...] = c2n

        # ---- vocab projection of dropout(h2) (store to VMEM-resident output)
        logits = (jnp.dot((h2 * drop2).astype(bf16), wm_ref[...],
                          preferred_element_type=f32) + bm_ref[...])
        out_ref[t] = logits.astype(out_ref.dtype)
        return carry

    jax.lax.fori_loop(0, T, step, 0)


def _nbytes(a):
    return int(a.size) * jnp.dtype(a.dtype).itemsize


def topdown_decoder_forward(v, v_mean, captions, lengths, params, *,
                            dropout_prob=0.5, dropout_rng=None):
    """Pallas forward of TopDownDecoder.  `lengths` is unused (as in torch)."""
    del lengths
    assert dropout_prob < 1.0
    B, N, H = v.shape
    T = int(captions.shape[1])
    E = params["embed"].shape[1]
    V = params["wm"].shape[1]
    f32 = jnp.float32
    bf16 = jnp.bfloat16

    # TODO(synk): embedding gather stays on host (data-dependent per-token gather).
    x1 = jnp.maximum(jnp.take(params["embed"], captions, axis=0), 0.0)   # [B, T, E]
    if dropout_prob > 0.0:
        # NOTE: with dropout_rng=None a fixed key is used => identical masks
        # across calls; pass a fresh key per call for training-style dropout.
        if dropout_rng is None:
            dropout_rng = jax.random.PRNGKey(0)
        k1, k2 = jax.random.split(dropout_rng)
        keep = 1.0 - dropout_prob
        x1 = x1 * (jax.random.bernoulli(k1, keep, (B, T, E)).astype(f32) / keep)
        m_h2 = jax.random.bernoulli(k2, keep, (T, B, H)).astype(f32) / keep
    else:
        m_h2 = jnp.ones((T, B, H), f32)
    m_h2 = m_h2.astype(bf16)   # values are 0 or 1/keep -> exact in bf16

    # ---- hoisted, time-invariant projections (off the recurrent critical path)
    x1_t = jnp.transpose(x1, (1, 0, 2))                                   # [T, B, E]
    x1p = jnp.dot(x1_t.reshape(T * B, E), params["w1_x"],
                  preferred_element_type=f32).reshape(T, B, 4 * H)
    vm1 = jnp.dot(v_mean, params["w1_vm"],
                  preferred_element_type=f32) + params["b1"]              # [B, 4H]
    vv = jnp.dot(v, params["wv"],
                 preferred_element_type=f32) + params["bv"]               # [B, N, H]

    # ---- fused recurrent weights (rows match the [alpha_v | h1 | h2] layout),
    # stored bf16 for MXU input / VMEM footprint; accumulation stays f32.
    w1r = jnp.concatenate([params["u1"], params["w1_h2"]], axis=0).astype(bf16)
    w2r = jnp.concatenate([params["w2_av"], params["w2_h1"], params["u2"]],
                          axis=0).astype(bf16)

    inputs = (
        x1p.astype(f32), m_h2, v.astype(f32), vv.astype(f32), vm1.astype(f32),
        w1r,
        params["wg"].astype(bf16), params["bg"].astype(f32),
        params["wh"].astype(f32), params["bh"].astype(f32),
        w2r, params["b2"].astype(f32),
        params["wm"].astype(bf16), params["bm"].astype(f32),
    )

    # explicit scoped-VMEM budget sized from the actual resident footprint
    resident = (sum(_nbytes(a) for a in inputs)
                + T * B * V * 4                 # output block
                + (3 * B * H + 2 * B * H) * 4)  # scratch
    vmem_limit = int(min(max(2 * resident + (4 << 20), 16 << 20), 56 << 20))

    flops_step = (2 * B * (2 * H) * (4 * H)     # fused att LSTM dot
                  + 2 * B * H * H               # w_g
                  + 4 * B * N * H               # alpha + alpha_v
                  + 2 * B * (3 * H) * (4 * H)   # fused lan LSTM dot
                  + 2 * B * H * V)              # mlp
    cost = pl.CostEstimate(
        flops=T * flops_step,
        transcendentals=T * B * (10 * H + N * H + N),
        bytes_accessed=resident,
    )

    out = pl.pallas_call(
        _topdown_decoder_kernel,
        out_shape=jax.ShapeDtypeStruct((T, B, V), f32),
        scratch_shapes=[
            pltpu.VMEM((B, 3 * H), f32),   # [alpha_v | h1 | h2]
            pltpu.VMEM((B, H), f32),       # c1
            pltpu.VMEM((B, H), f32),       # c2
        ],
        compiler_params=pltpu.CompilerParams(vmem_limit_bytes=vmem_limit),
        cost_estimate=cost,
    )(*inputs)

    return jnp.transpose(out, (1, 0, 2))   # [B, T, V]


def _decoder_reference(v, v_mean, captions, p):
    """Pure-JAX reference of the torch forward (dropout disabled), using the
    same mixed precision as the kernel: recurrent matmuls take bf16 operands
    with f32 accumulation; hoisted projections and VPU math stay f32."""
    B, N, H = v.shape
    T = captions.shape[1]
    bf16 = jnp.bfloat16

    def mdot(a, b):   # bf16-in / f32-accumulate, like the in-kernel MXU dots
        return jnp.dot(a.astype(bf16), b.astype(bf16),
                       preferred_element_type=jnp.float32)

    def gates(g, c):
        i = jax.nn.sigmoid(g[:, 0 * H:1 * H])
        f = jax.nn.sigmoid(g[:, 1 * H:2 * H])
        gg = jnp.tanh(g[:, 2 * H:3 * H])
        o = jax.nn.sigmoid(g[:, 3 * H:4 * H])
        c_new = f * c + i * gg
        return o * jnp.tanh(c_new), c_new

    emb = jnp.maximum(jnp.take(p["embed"], captions, axis=0), 0.0)
    vv = jnp.dot(v, p["wv"], preferred_element_type=jnp.float32) + p["bv"]
    vm1 = jnp.dot(v_mean, p["w1_vm"], preferred_element_type=jnp.float32) + p["b1"]
    h1 = c1 = h2 = c2 = jnp.zeros((B, H), jnp.float32)
    outs = []
    for t in range(T):
        x1 = emb[:, t]
        g1 = (mdot(h2, p["w1_h2"]) + mdot(h1, p["u1"]) + vm1
              + jnp.dot(x1, p["w1_x"], preferred_element_type=jnp.float32))
        h1, c1 = gates(g1, c1)
        wg_h = mdot(h1, p["wg"]) + p["bg"]
        z = jnp.tanh(vv + wg_h[:, None, :])
        alpha = jnp.sum(z * p["wh"], axis=-1) + p["bh"]
        att = jax.nn.softmax(alpha, axis=1)
        alpha_v = jnp.sum(att[:, :, None] * v, axis=1)
        g2 = mdot(alpha_v, p["w2_av"]) + mdot(h1, p["w2_h1"]) + mdot(h2, p["u2"]) + p["b2"]
        h2, c2 = gates(g2, c2)
        outs.append(mdot(h2, p["wm"]) + p["bm"])
    return jnp.stack(outs, axis=1)


if __name__ == "__main__":
    B, N = 2, 8                       # batch, region features
    H, E, V, T = 128, 128, 256, 6     # hidden_size, embed_size, vocab_size, seq len

    key = jax.random.PRNGKey(0)
    ks = jax.random.split(key, 20)
    bound = 1.0 / (H ** 0.5)

    def u(k, shape, b=bound):
        return jax.random.uniform(k, shape, minval=-b, maxval=b, dtype=jnp.float32)

    params = {
        "embed": jax.random.uniform(ks[0], (V, E), minval=-0.1, maxval=0.1,
                                    dtype=jnp.float32),
        # att_lstm: W_ih split along cat(h2, v_mean, x1); gate order (i, f, g, o)
        "w1_h2": u(ks[1], (H, 4 * H)), "w1_vm": u(ks[2], (H, 4 * H)),
        "w1_x": u(ks[3], (E, 4 * H)),
        "u1": u(ks[4], (H, 4 * H)), "b1": u(ks[5], (1, 4 * H)),
        "wg": u(ks[6], (H, H)), "bg": u(ks[7], (1, H)),
        "wv": u(ks[8], (H, H)), "bv": u(ks[9], (1, H)),
        "wh": u(ks[10], (1, H)), "bh": u(ks[11], (1, 1)),
        # lan_lstm: W_ih split along cat(alpha_v, h1)
        "w2_av": u(ks[12], (H, 4 * H)), "w2_h1": u(ks[13], (H, 4 * H)),
        "u2": u(ks[14], (H, 4 * H)), "b2": u(ks[15], (1, 4 * H)),
        "wm": u(ks[16], (H, V)), "bm": u(ks[17], (1, V)),
    }

    v = jax.random.normal(ks[18], (B, N, H), dtype=jnp.float32)
    v_mean = jnp.mean(v, axis=1)
    captions = jax.random.randint(ks[19], (B, T), 0, V, dtype=jnp.int32)
    lengths = jnp.full((B,), T, dtype=jnp.int32)   # unused, as in the torch code

    # correctness check with dropout disabled (dropout == identity at p=0)
    out0 = topdown_decoder_forward(v, v_mean, captions, lengths, params,
                                   dropout_prob=0.0)
    ref = _decoder_reference(v, v_mean, captions, params)
    assert out0.shape == (B, T, V)
    err = float(jnp.max(jnp.abs(out0 - ref)))
    assert err < 1e-2, err

    # the module's default forward path (training-mode dropout p=0.5)
    out = topdown_decoder_forward(v, v_mean, captions, lengths, params,
                                  dropout_prob=0.5,
                                  dropout_rng=jax.random.PRNGKey(1))
    jax.block_until_ready(out)
    assert out.shape == (B, T, V)
    print("KERNEL_OK")
</pallas_src>

<mosaic_0001>
module attributes {stable_mosaic.version = 11 : i64} {
  func.func @_topdown_decoder_kernel(%arg0: memref<6x2x512xf32, #tpu.memory_space<vmem>>, %arg1: memref<6x2x128xbf16, #tpu.memory_space<vmem>>, %arg2: memref<2x8x128xf32, #tpu.memory_space<vmem>>, %arg3: memref<2x8x128xf32, #tpu.memory_space<vmem>>, %arg4: memref<2x512xf32, #tpu.memory_space<vmem>>, %arg5: memref<256x512xbf16, #tpu.memory_space<vmem>>, %arg6: memref<128x128xbf16, #tpu.memory_space<vmem>>, %arg7: memref<1x128xf32, #tpu.memory_space<vmem>>, %arg8: memref<1x128xf32, #tpu.memory_space<vmem>>, %arg9: memref<1x1xf32, #tpu.memory_space<vmem>>, %arg10: memref<384x512xbf16, #tpu.memory_space<vmem>>, %arg11: memref<1x512xf32, #tpu.memory_space<vmem>>, %arg12: memref<128x256xbf16, #tpu.memory_space<vmem>>, %arg13: memref<1x256xf32, #tpu.memory_space<vmem>>, %arg14: memref<6x2x256xf32, #tpu.memory_space<vmem>>, %arg15: memref<2x384xf32, #tpu.memory_space<vmem>>, %arg16: memref<2x128xf32, #tpu.memory_space<vmem>>, %arg17: memref<2x128xf32, #tpu.memory_space<vmem>>) attributes {dimension_semantics = [], scalar_prefetch = 0 : i64, scratch_operands = 3 : i64, tpu.core_type = #tpu.core_type<tc>} {
    %cst = arith.constant 0.000000e+00 : f32
    %0 = vector.broadcast %cst : f32 to vector<2x384xf32>
    %c0 = arith.constant 0 : index
    %c0_0 = arith.constant 0 : index
    %1 = vector.load %arg15[%c0, %c0_0] : memref<2x384xf32, #tpu.memory_space<vmem>>, vector<2x384xf32>
    tpu.vector_store %arg15[%c0, %c0_0], %0 {strides = array<i32>} : memref<2x384xf32, #tpu.memory_space<vmem>>, vector<2x384xf32>,
    %cst_1 = arith.constant 0.000000e+00 : f32
    %2 = vector.broadcast %cst_1 : f32 to vector<2x128xf32>
    %c0_2 = arith.constant 0 : index
    %c0_3 = arith.constant 0 : index
    %3 = vector.load %arg16[%c0_2, %c0_3] : memref<2x128xf32, #tpu.memory_space<vmem>>, vector<2x128xf32>
    tpu.vector_store %arg16[%c0_2, %c0_3], %2 {strides = array<i32>} : memref<2x128xf32, #tpu.memory_space<vmem>>, vector<2x128xf32>,
    %cst_4 = arith.constant 0.000000e+00 : f32
    %4 = vector.broadcast %cst_4 : f32 to vector<2x128xf32>
    %c0_5 = arith.constant 0 : index
    %c0_6 = arith.constant 0 : index
    %5 = vector.load %arg17[%c0_5, %c0_6] : memref<2x128xf32, #tpu.memory_space<vmem>>, vector<2x128xf32>
    tpu.vector_store %arg17[%c0_5, %c0_6], %4 {strides = array<i32>} : memref<2x128xf32, #tpu.memory_space<vmem>>, vector<2x128xf32>,
    %c0_i32 = arith.constant 0 : i32
    %c6_i32 = arith.constant 6 : i32
    %6 = arith.addi %c0_i32, %c6_i32 : i32
    %c1_i32 = arith.constant 1 : i32
    scf.for %arg18 = %c0_i32 to %6 step %c1_i32  : i32 {
      %7 = arith.index_cast %arg18 : i32 to index
      %c0_8 = arith.constant 0 : index
      %c0_9 = arith.constant 0 : index
      %8 = vector.load %arg0[%7, %c0_8, %c0_9] : memref<6x2x512xf32, #tpu.memory_space<vmem>>, vector<1x2x512xf32>
      %9 = vector.shape_cast %8 : vector<1x2x512xf32> to vector<2x512xf32>
      %10 = arith.index_cast %arg18 : i32 to index
      %c0_10 = arith.constant 0 : index
      %c0_11 = arith.constant 0 : index
      %11 = vector.load %arg1[%10, %c0_10, %c0_11] : memref<6x2x128xbf16, #tpu.memory_space<vmem>>, vector<1x2x128xbf16>
      %12 = vector.shape_cast %11 : vector<1x2x128xbf16> to vector<2x128xbf16>
      %13 = arith.extf %12 : vector<2x128xbf16> to vector<2x128xf32>
      %c0_12 = arith.constant 0 : index
      %c0_13 = arith.constant 0 : index
      %14 = vector.load %arg16[%c0_12, %c0_13] : memref<2x128xf32, #tpu.memory_space<vmem>>, vector<2x128xf32>
      %c0_14 = arith.constant 0 : index
      %c0_15 = arith.constant 0 : index
      %15 = vector.load %arg17[%c0_14, %c0_15] : memref<2x128xf32, #tpu.memory_space<vmem>>, vector<2x128xf32>
      %c0_16 = arith.constant 0 : index
      %c128 = arith.constant 128 : index
      %16 = vector.load %arg15[%c0_16, %c128] : memref<2x384xf32, #tpu.memory_space<vmem>>, vector<2x256xf32>
      %17 = arith.truncf %16 : vector<2x256xf32> to vector<2x256xbf16>
      %c0_17 = arith.constant 0 : index
      %c0_18 = arith.constant 0 : index
      %18 = vector.load %arg5[%c0_17, %c0_18] : memref<256x512xbf16, #tpu.memory_space<vmem>>, vector<256x512xbf16>
      %cst_19 = arith.constant dense<0.000000e+00> : vector<2x512xf32>
      %19 = tpu.matmul %17, %18, %cst_19 {dimension_numbers = #tpu.dot_dimension_numbers<[1], [0], [0], [1], [0, 0, 1, 1], [], []>} : vector<2x256xbf16>, vector<256x512xbf16>, vector<2x512xf32> -> vector<2x512xf32>
      %c0_20 = arith.constant 0 : index
      %c0_21 = arith.constant 0 : index
      %20 = vector.load %arg4[%c0_20, %c0_21] : memref<2x512xf32, #tpu.memory_space<vmem>>, vector<2x512xf32>
      %21 = arith.addf %19, %20 : vector<2x512xf32>
      %22 = arith.addf %21, %9 : vector<2x512xf32>
      %23 = vector.extract_strided_slice %22 {offsets = [0, 0], sizes = [2, 128], strides = [1, 1]} : vector<2x512xf32> to vector<2x128xf32>
      %cst_22 = arith.constant 5.000000e-01 : f32
      %24 = vector.broadcast %cst_22 : f32 to vector<2x128xf32>
      %25 = arith.mulf %24, %23 : vector<2x128xf32>
      %26 = math.tanh %25 : vector<2x128xf32>
      %cst_23 = arith.constant 1.000000e+00 : f32
      %27 = vector.broadcast %cst_23 : f32 to vector<2x128xf32>
      %28 = arith.addf %26, %27 : vector<2x128xf32>
      %cst_24 = arith.constant 5.000000e-01 : f32
      %29 = vector.broadcast %cst_24 : f32 to vector<2x128xf32>
      %30 = arith.mulf %29, %28 : vector<2x128xf32>
      %31 = vector.extract_strided_slice %22 {offsets = [0, 128], sizes = [2, 128], strides = [1, 1]} : vector<2x512xf32> to vector<2x128xf32>
      %cst_25 = arith.constant 5.000000e-01 : f32
      %32 = vector.broadcast %cst_25 : f32 to vector<2x128xf32>
      %33 = arith.mulf %32, %31 : vector<2x128xf32>
      %34 = math.tanh %33 : vector<2x128xf32>
      %cst_26 = arith.constant 1.000000e+00 : f32
      %35 = vector.broadcast %cst_26 : f32 to vector<2x128xf32>
      %36 = arith.addf %34, %35 : vector<2x128xf32>
      %cst_27 = arith.constant 5.000000e-01 : f32
      %37 = vector.broadcast %cst_27 : f32 to vector<2x128xf32>
      %38 = arith.mulf %37, %36 : vector<2x128xf32>
      %39 = vector.extract_strided_slice %22 {offsets = [0, 256], sizes = [2, 128], strides = [1, 1]} : vector<2x512xf32> to vector<2x128xf32>
      %40 = math.tanh %39 : vector<2x128xf32>
      %41 = vector.extract_strided_slice %22 {offsets = [0, 384], sizes = [2, 128], strides = [1, 1]} : vector<2x512xf32> to vector<2x128xf32>
      %cst_28 = arith.constant 5.000000e-01 : f32
      %42 = vector.broadcast %cst_28 : f32 to vector<2x128xf32>
      %43 = arith.mulf %42, %41 : vector<2x128xf32>
      %44 = math.tanh %43 : vector<2x128xf32>
      %cst_29 = arith.constant 1.000000e+00 : f32
      %45 = vector.broadcast %cst_29 : f32 to vector<2x128xf32>
      %46 = arith.addf %44, %45 : vector<2x128xf32>
      %cst_30 = arith.constant 5.000000e-01 : f32
      %47 = vector.broadcast %cst_30 : f32 to vector<2x128xf32>
      %48 = arith.mulf %47, %46 : vector<2x128xf32>
      %49 = arith.mulf %38, %14 : vector<2x128xf32>
      %50 = arith.mulf %30, %40 : vector<2x128xf32>
      %51 = arith.addf %49, %50 : vector<2x128xf32>
      %52 = math.tanh %51 : vector<2x128xf32>
      %53 = arith.mulf %48, %52 : vector<2x128xf32>
      %c0_31 = arith.constant 0 : index
      %c128_32 = arith.constant 128 : index
      %54 = vector.load %arg15[%c0_31, %c128_32] : memref<2x384xf32, #tpu.memory_space<vmem>>, vector<2x128xf32>
      tpu.vector_store %arg15[%c0_31, %c128_32], %53 {strides = array<i32>} : memref<2x384xf32, #tpu.memory_space<vmem>>, vector<2x128xf32>,
      %c0_33 = arith.constant 0 : index
      %c0_34 = arith.constant 0 : index
      %55 = vector.load %arg16[%c0_33, %c0_34] : memref<2x128xf32, #tpu.memory_space<vmem>>, vector<2x128xf32>
      tpu.vector_store %arg16[%c0_33, %c0_34], %51 {strides = array<i32>} : memref<2x128xf32, #tpu.memory_space<vmem>>, vector<2x128xf32>,
      %56 = arith.truncf %53 : vector<2x128xf32> to vector<2x128xbf16>
      %c0_35 = arith.constant 0 : index
      %c0_36 = arith.constant 0 : index
      %57 = vector.load %arg6[%c0_35, %c0_36] : memref<128x128xbf16, #tpu.memory_space<vmem>>, vector<128x128xbf16>
      %cst_37 = arith.constant dense<0.000000e+00> : vector<2x128xf32>
      %58 = tpu.matmul %56, %57, %cst_37 {dimension_numbers = #tpu.dot_dimension_numbers<[1], [0], [0], [1], [0, 0, 1, 1], [], []>} : vector<2x128xbf16>, vector<128x128xbf16>, vector<2x128xf32> -> vector<2x128xf32>
      %c0_38 = arith.constant 0 : index
      %c0_39 = arith.constant 0 : index
      %59 = vector.load %arg7[%c0_38, %c0_39] : memref<1x128xf32, #tpu.memory_space<vmem>>, vector<1x128xf32>
      %60 = vector.broadcast %59 : vector<1x128xf32> to vector<2x128xf32>
      %61 = arith.addf %58, %60 : vector<2x128xf32>
      %c0_40 = arith.constant 0 : index
      %c0_41 = arith.constant 0 : index
      %c0_42 = arith.constant 0 : index
      %62 = vector.load %arg3[%c0_40, %c0_41, %c0_42] : memref<2x8x128xf32, #tpu.memory_space<vmem>>, vector<2x8x128xf32>
      %63 = vector.shape_cast %61 : vector<2x128xf32> to vector<2x1x128xf32>
      %64 = vector.broadcast %63 : vector<2x1x128xf32> to vector<2x8x128xf32>
      %65 = arith.addf %62, %64 : vector<2x8x128xf32>
      %66 = math.tanh %65 : vector<2x8x128xf32>
      %c0_43 = arith.constant 0 : index
      %c0_44 = arith.constant 0 : index
      %67 = vector.load %arg8[%c0_43, %c0_44] : memref<1x128xf32, #tpu.memory_space<vmem>>, vector<1x128xf32>
      %68 = vector.shape_cast %67 : vector<1x128xf32> to vector<1x1x128xf32>
      %69 = vector.broadcast %68 : vector<1x1x128xf32> to vector<2x8x128xf32>
      %70 = arith.mulf %66, %69 : vector<2x8x128xf32>
      %cst_45 = arith.constant dense<0.000000e+00> : vector<2x8xf32>
      %71 = vector.multi_reduction <add>, %70, %cst_45 [2] : vector<2x8x128xf32> to vector<2x8xf32>
      %c0_46 = arith.constant 0 : index
      %c0_47 = arith.constant 0 : index
      %72 = vector.load %arg9[%c0_46, %c0_47] : memref<1x1xf32, #tpu.memory_space<vmem>>, vector<1x1xf32>
      %73 = vector.broadcast %72 : vector<1x1xf32> to vector<2x8xf32>
      %74 = arith.addf %71, %73 : vector<2x8xf32>
      %cst_48 = arith.constant dense<0xFF800000> : vector<2xf32>
      %75 = vector.multi_reduction <maximumf>, %74, %cst_48 [1] : vector<2x8xf32> to vector<2xf32>
      %76 = vector.shape_cast %75 : vector<2xf32> to vector<2x1xf32>
      %77 = vector.broadcast %76 : vector<2x1xf32> to vector<2x8xf32>
      %78 = arith.subf %74, %77 : vector<2x8xf32>
      %79 = math.exp %78 : vector<2x8xf32>
      %cst_49 = arith.constant dense<0.000000e+00> : vector<2xf32>
      %80 = vector.multi_reduction <add>, %79, %cst_49 [1] : vector<2x8xf32> to vector<2xf32>
      %81 = vector.shape_cast %80 : vector<2xf32> to vector<2x1xf32>
      %82 = tpu.reciprocal %81 {approx = true} : vector<2x1xf32> -> vector<2x1xf32>
      %83 = vector.broadcast %82 : vector<2x1xf32> to vector<2x8xf32>
      %84 = arith.mulf %79, %83 : vector<2x8xf32>
      %85 = vector.shape_cast %84 : vector<2x8xf32> to vector<2x8x1xf32>
      %c0_50 = arith.constant 0 : index
      %c0_51 = arith.constant 0 : index
      %c0_52 = arith.constant 0 : index
      %86 = vector.load %arg2[%c0_50, %c0_51, %c0_52] : memref<2x8x128xf32, #tpu.memory_space<vmem>>, vector<2x8x128xf32>
      %87 = vector.broadcast %85 : vector<2x8x1xf32> to vector<2x8x128xf32>
      %88 = arith.mulf %87, %86 : vector<2x8x128xf32>
      %cst_53 = arith.constant dense<0.000000e+00> : vector<2x128xf32>
      %89 = vector.multi_reduction <add>, %88, %cst_53 [1] : vector<2x8x128xf32> to vector<2x128xf32>
      %c0_54 = arith.constant 0 : index
      %c0_55 = arith.constant 0 : index
      %90 = vector.load %arg15[%c0_54, %c0_55] : memref<2x384xf32, #tpu.memory_space<vmem>>, vector<2x128xf32>
      tpu.vector_store %arg15[%c0_54, %c0_55], %89 {strides = array<i32>} : memref<2x384xf32, #tpu.memory_space<vmem>>, vector<2x128xf32>,
      %c0_56 = arith.constant 0 : index
      %c0_57 = arith.constant 0 : index
      %91 = vector.load %arg15[%c0_56, %c0_57] : memref<2x384xf32, #tpu.memory_space<vmem>>, vector<2x384xf32>
      %92 = arith.truncf %91 : vector<2x384xf32> to vector<2x384xbf16>
      %c0_58 = arith.constant 0 : index
      %c0_59 = arith.constant 0 : index
      %93 = vector.load %arg10[%c0_58, %c0_59] : memref<384x512xbf16, #tpu.memory_space<vmem>>, vector<384x512xbf16>
      %cst_60 = arith.constant dense<0.000000e+00> : vector<2x512xf32>
      %94 = tpu.matmul %92, %93, %cst_60 {dimension_numbers = #tpu.dot_dimension_numbers<[1], [0], [0], [1], [0, 0, 1, 1], [], []>} : vector<2x384xbf16>, vector<384x512xbf16>, vector<2x512xf32> -> vector<2x512xf32>
      %c0_61 = arith.constant 0 : index
      %c0_62 = arith.constant 0 : index
      %95 = vector.load %arg11[%c0_61, %c0_62] : memref<1x512xf32, #tpu.memory_space<vmem>>, vector<1x512xf32>
      %96 = vector.broadcast %95 : vector<1x512xf32> to vector<2x512xf32>
      %97 = arith.addf %94, %96 : vector<2x512xf32>
      %98 = vector.extract_strided_slice %97 {offsets = [0, 0], sizes = [2, 128], strides = [1, 1]} : vector<2x512xf32> to vector<2x128xf32>
      %cst_63 = arith.constant 5.000000e-01 : f32
      %99 = vector.broadcast %cst_63 : f32 to vector<2x128xf32>
      %100 = arith.mulf %99, %98 : vector<2x128xf32>
      %101 = math.tanh %100 : vector<2x128xf32>
      %cst_64 = arith.constant 1.000000e+00 : f32
      %102 = vector.broadcast %cst_64 : f32 to vector<2x128xf32>
      %103 = arith.addf %101, %102 : vector<2x128xf32>
      %cst_65 = arith.constant 5.000000e-01 : f32
      %104 = vector.broadcast %cst_65 : f32 to vector<2x128xf32>
      %105 = arith.mulf %104, %103 : vector<2x128xf32>
      %106 = vector.extract_strided_slice %97 {offsets = [0, 128], sizes = [2, 128], strides = [1, 1]} : vector<2x512xf32> to vector<2x128xf32>
      %cst_66 = arith.constant 5.000000e-01 : f32
      %107 = vector.broadcast %cst_66 : f32 to vector<2x128xf32>
      %108 = arith.mulf %107, %106 : vector<2x128xf32>
      %109 = math.tanh %108 : vector<2x128xf32>
      %cst_67 = arith.constant 1.000000e+00 : f32
      %110 = vector.broadcast %cst_67 : f32 to vector<2x128xf32>
      %111 = arith.addf %109, %110 : vector<2x128xf32>
      %cst_68 = arith.constant 5.000000e-01 : f32
      %112 = vector.broadcast %cst_68 : f32 to vector<2x128xf32>
      %113 = arith.mulf %112, %111 : vector<2x128xf32>
      %114 = vector.extract_strided_slice %97 {offsets = [0, 256], sizes = [2, 128], strides = [1, 1]} : vector<2x512xf32> to vector<2x128xf32>
      %115 = math.tanh %114 : vector<2x128xf32>
      %116 = vector.extract_strided_slice %97 {offsets = [0, 384], sizes = [2, 128], strides = [1, 1]} : vector<2x512xf32> to vector<2x128xf32>
      %cst_69 = arith.constant 5.000000e-01 : f32
      %117 = vector.broadcast %cst_69 : f32 to vector<2x128xf32>
      %118 = arith.mulf %117, %116 : vector<2x128xf32>
      %119 = math.tanh %118 : vector<2x128xf32>
      %cst_70 = arith.constant 1.000000e+00 : f32
      %120 = vector.broadcast %cst_70 : f32 to vector<2x128xf32>
      %121 = arith.addf %119, %120 : vector<2x128xf32>
      %cst_71 = arith.constant 5.000000e-01 : f32
      %122 = vector.broadcast %cst_71 : f32 to vector<2x128xf32>
      %123 = arith.mulf %122, %121 : vector<2x128xf32>
      %124 = arith.mulf %113, %15 : vector<2x128xf32>
      %125 = arith.mulf %105, %115 : vector<2x128xf32>
      %126 = arith.addf %124, %125 : vector<2x128xf32>
      %127 = math.tanh %126 : vector<2x128xf32>
      %128 = arith.mulf %123, %127 : vector<2x128xf32>
      %c0_72 = arith.constant 0 : index
      %c256 = arith.constant 256 : index
      %129 = vector.load %arg15[%c0_72, %c256] : memref<2x384xf32, #tpu.memory_space<vmem>>, vector<2x128xf32>
      tpu.vector_store %arg15[%c0_72, %c256], %128 {strides = array<i32>} : memref<2x384xf32, #tpu.memory_space<vmem>>, vector<2x128xf32>,
      %c0_73 = arith.constant 0 : index
      %c0_74 = arith.constant 0 : index
      %130 = vector.load %arg17[%c0_73, %c0_74] : memref<2x128xf32, #tpu.memory_space<vmem>>, vector<2x128xf32>
      tpu.vector_store %arg17[%c0_73, %c0_74], %126 {strides = array<i32>} : memref<2x128xf32, #tpu.memory_space<vmem>>, vector<2x128xf32>,
      %131 = arith.mulf %128, %13 : vector<2x128xf32>
      %132 = arith.truncf %131 : vector<2x128xf32> to vector<2x128xbf16>
      %c0_75 = arith.constant 0 : index
      %c0_76 = arith.constant 0 : index
      %133 = vector.load %arg12[%c0_75, %c0_76] : memref<128x256xbf16, #tpu.memory_space<vmem>>, vector<128x256xbf16>
      %cst_77 = arith.constant dense<0.000000e+00> : vector<2x256xf32>
      %134 = tpu.matmul %132, %133, %cst_77 {dimension_numbers = #tpu.dot_dimension_numbers<[1], [0], [0], [1], [0, 0, 1, 1], [], []>} : vector<2x128xbf16>, vector<128x256xbf16>, vector<2x256xf32> -> vector<2x256xf32>
      %c0_78 = arith.constant 0 : index
      %c0_79 = arith.constant 0 : index
      %135 = vector.load %arg13[%c0_78, %c0_79] : memref<1x256xf32, #tpu.memory_space<vmem>>, vector<1x256xf32>
      %136 = vector.broadcast %135 : vector<1x256xf32> to vector<2x256xf32>
      %137 = arith.addf %134, %136 : vector<2x256xf32>
      %138 = arith.index_cast %arg18 : i32 to index
      %c0_80 = arith.constant 0 : index
      %c0_81 = arith.constant 0 : index
      %139 = vector.load %arg14[%138, %c0_80, %c0_81] : memref<6x2x256xf32, #tpu.memory_space<vmem>>, vector<1x2x256xf32>
      %140 = vector.shape_cast %139 : vector<1x2x256xf32> to vector<2x256xf32>
      %141 = vector.shape_cast %137 : vector<2x256xf32> to vector<1x2x256xf32>
      tpu.vector_store %arg14[%138, %c0_80, %c0_81], %141 {strides = array<i32>} : memref<6x2x256xf32, #tpu.memory_space<vmem>>, vector<1x2x256xf32>,
    }
    %c6_i32_7 = arith.constant 6 : i32
    return
  }
}

</mosaic_0001>

<llo_original>
// kernel: tpu_custom_call.1
$region0: #{tpu_custom_call.1}
  #allocation0 [shape = 'u32[]', space=smem, size = 0x4, offset = 0x4, fixed_abs, tag = 'smem constant byte address 0x4 - core index']
  #allocation1 [shape = 'u32[144,128]{1,0:T(1,128)}', space=vmem, size = 0x12000, scoped, tag = 'internal scratch']
  #allocation2 [shape = 'f32[2,384]{1,0:T(2,128)}', space=vmem, size = 0xc00, scoped, tag = 'scratch operand']
  #allocation3 [shape = 'f32[2,128]{1,0:T(2,128)}', space=vmem, size = 0x400, scoped, tag = 'scratch operand']
  #allocation4 [shape = 'f32[2,128]{1,0:T(2,128)}', space=vmem, size = 0x400, scoped, tag = 'scratch operand']
  #allocation5 [shape = 'f32[1,1]{1,0:T(1,128)S(1)}', space=vmem, size = 0x200, scoped, tag = 'scoped memory for tpu_custom_call.1']
  %s0 = inlined_call_operand.hbm [shape: f32[6,2,512], index: 0, kind: input, shape index: {}]
  %s1 = inlined_call_operand.vmem [shape: bf16[6,2,128], index: 1, kind: input, shape index: {}]
  %s2 = inlined_call_operand.hbm [shape: f32[2,8,128], index: 2, kind: input, shape index: {}]
  %s3 = inlined_call_operand.hbm [shape: f32[2,8,128], index: 3, kind: input, shape index: {}]
  %s4 = inlined_call_operand.vmem [shape: f32[2,512], index: 4, kind: input, shape index: {}]
  %s5 = inlined_call_operand.hbm [shape: bf16[256,512], index: 5, kind: input, shape index: {}]
  %s6 = inlined_call_operand.hbm [shape: bf16[128,128], index: 6, kind: input, shape index: {}]
  %s7 = inlined_call_operand.vmem [shape: f32[1,128], index: 7, kind: input, shape index: {}]
  %s8 = inlined_call_operand.vmem [shape: f32[1,128], index: 8, kind: input, shape index: {}]
  %s9 = inlined_call_operand.<no memory space> [shape: f32[1,1], index: 9, kind: input, shape index: {}]
  %s10 = inlined_call_operand.hbm [shape: bf16[384,512], index: 10, kind: input, shape index: {}]
  %s11 = inlined_call_operand.vmem [shape: f32[1,512], index: 11, kind: input, shape index: {}]
  %s12 = inlined_call_operand.hbm [shape: bf16[128,256], index: 12, kind: input, shape index: {}]
  %s13 = inlined_call_operand.vmem [shape: f32[1,256], index: 13, kind: input, shape index: {}]
  %s14 = inlined_call_operand.hbm [shape: f32[6,2,256], index: 14, kind: output, shape index: {}]
  %s15 = sld [smem:[#allocation0]]
  $region101: #{tpu_custom_call.1} parent=0
    _
  %s17 = ssub.s32 1, %s15
  %s18 = scalar_select 0, %s17, %s15
  %v19 = vstv %s9
  %20 = vst [vmem:[#allocation5] sm:$0x1] %v19
  $region1: #{tpu_custom_call.1} parent=0
    #allocation6 [shape = 'u8[24576]{0}', space=vmem, size = 0x6000, scoped, tag = 'input window, operand 0, single buffered']
    #allocation7 [shape = 's32[1]{0}', space=sflag, size = 0x4, scoped, tag = 'scoped memory for tpu_custom_call.1']
    #allocation8 [shape = 's32[1]{0}', space=sflag, size = 0x4, scoped, tag = 'scoped memory for tpu_custom_call.1']
    #allocation9 [shape = 'u8[8192]{0}', space=vmem, size = 0x2000, scoped, tag = 'input window, operand 2, single buffered']
    #allocation10 [shape = 's32[1]{0}', space=sflag, size = 0x4, scoped, tag = 'scoped memory for tpu_custom_call.1']
    #allocation11 [shape = 'u8[8192]{0}', space=vmem, size = 0x2000, scoped, tag = 'input window, operand 3, single buffered']
    #allocation12 [shape = 'u8[262144]{0}', space=vmem, size = 0x40000, scoped, tag = 'input window, operand 5, single buffered']
    #allocation13 [shape = 's32[1]{0}', space=sflag, size = 0x4, scoped, tag = 'scoped memory for tpu_custom_call.1']
    #allocation14 [shape = 'u8[32768]{0}', space=vmem, size = 0x8000, scoped, tag = 'input window, operand 6, single buffered']
    #allocation15 [shape = 'u8[393216]{0}', space=vmem, size = 0x60000, scoped, tag = 'input window, operand 10, single buffered']
    #allocation16 [shape = 's32[1]{0}', space=sflag, size = 0x4, scoped, tag = 'scoped memory for tpu_custom_call.1']
    #allocation17 [shape = 'u8[65536]{0}', space=vmem, size = 0x10000, scoped, tag = 'input window, operand 12, single buffered']
    #allocation18 [shape = 'u8[12288]{0}', space=vmem, size = 0x3000, scoped, tag = 'output window, operand 0, single buffered']
    %21 = vsyncpa [#allocation7], 0
    %22 = vsyncpa [#allocation10], 0
    %23 = vsyncpa [#allocation13], 0
    %24 = vsyncpa [#allocation16], 0
    %25 = vsyncpa [#allocation8], 0
    // Predicated region
    $region2: #{tpu_custom_call.1} parent=1 // pred_check
      _
    $region3: #{tpu_custom_call.1} parent=1 // pred_check_branch
      %27 = sbr.rel (0) target = $region5
    $region4: #{tpu_custom_call.1} parent=1 // pred_region
      %s29 = ssub.s32 768, 768
      %30 = vsyncadd [#allocation7], %s29
      %s31 = sshll.u32 [#allocation6], 4
      %s32 = int_to_ptr.vmem [resolvable:$true] %s31
      %37 = dma.hbm_to_vmem [thread:$0]  %s0, 768, %s32, [#allocation7], 128, 128, 8
    $region5: #{tpu_custom_call.1} parent=1 // pred_fallthru
      _
    // Predicated region
    $region6: #{tpu_custom_call.1} parent=1 // pred_check
      _
    $region7: #{tpu_custom_call.1} parent=1 // pred_check_branch
      %39 = sbr.rel (0) target = $region9
    $region8: #{tpu_custom_call.1} parent=1 // pred_region
      _
    $region9: #{tpu_custom_call.1} parent=1 // pred_fallthru
      _
    // Predicated region
    $region10: #{tpu_custom_call.1} parent=1 // pred_check
      _
    $region11: #{tpu_custom_call.1} parent=1 // pred_check_branch
      %41 = sbr.rel (0) target = $region13
    $region12: #{tpu_custom_call.1} parent=1 // pred_region
      %s43 = ssub.s32 256, 256
      %44 = vsyncadd [#allocation10], %s43
      %s45 = sshll.u32 [#allocation9], 4
      %s46 = int_to_ptr.vmem [resolvable:$true] %s45
      %51 = dma.hbm_to_vmem [thread:$0]  %s2, 256, %s46, [#allocation10], 128, 128, 8
    $region13: #{tpu_custom_call.1} parent=1 // pred_fallthru
      _
    // Predicated region
    $region14: #{tpu_custom_call.1} parent=1 // pred_check
      _
    $region15: #{tpu_custom_call.1} parent=1 // pred_check_branch
      %53 = sbr.rel (0) target = $region17
    $region16: #{tpu_custom_call.1} parent=1 // pred_region
      %s55 = ssub.s32 256, 256
      %56 = vsyncadd [#allocation10], %s55
      %s57 = sshll.u32 [#allocation11], 4
      %s58 = int_to_ptr.vmem [resolvable:$true] %s57
      %63 = dma.hbm_to_vmem [thread:$0]  %s3, 256, %s58, [#allocation10], 128, 128, 8
    $region17: #{tpu_custom_call.1} parent=1 // pred_fallthru
      _
    // Predicated region
    $region18: #{tpu_custom_call.1} parent=1 // pred_check
      _
    $region19: #{tpu_custom_call.1} parent=1 // pred_check_branch
      %65 = sbr.rel (0) target = $region21
    $region20: #{tpu_custom_call.1} parent=1 // pred_region
      _
    $region21: #{tpu_custom_call.1} parent=1 // pred_fallthru
      _
    // Predicated region
    $region22: #{tpu_custom_call.1} parent=1 // pred_check
      _
    $region23: #{tpu_custom_call.1} parent=1 // pred_check_branch
      %67 = sbr.rel (0) target = $region25
    $region24: #{tpu_custom_call.1} parent=1 // pred_region
      %s69 = ssub.s32 8192, 8192
      %70 = vsyncadd [#allocation13], %s69
      %s71 = sshll.u32 [#allocation12], 4
      %s72 = int_to_ptr.vmem [resolvable:$true] %s71
      %77 = dma.hbm_to_vmem [thread:$0]  %s5, 8192, %s72, [#allocation13], 256, 256, 16
    $region25: #{tpu_custom_call.1} parent=1 // pred_fallthru
      _
    // Predicated region
    $region26: #{tpu_custom_call.1} parent=1 // pred_check
      _
    $region27: #{tpu_custom_call.1} parent=1 // pred_check_branch
      %79 = sbr.rel (0) target = $region29
    $region28: #{tpu_custom_call.1} parent=1 // pred_region
      %s81 = ssub.s32 1024, 1024
      %82 = vsyncadd [#allocation13], %s81
      %s83 = sshll.u32 [#allocation14], 4
      %s84 = int_to_ptr.vmem [resolvable:$true] %s83
      %89 = dma.hbm_to_vmem [thread:$0]  %s6, 1024, %s84, [#allocation13], 64, 64, 4
    $region29: #{tpu_custom_call.1} parent=1 // pred_fallthru
      _
    // Predicated region
    $region30: #{tpu_custom_call.1} parent=1 // pred_check
      _
    $region31: #{tpu_custom_call.1} parent=1 // pred_check_branch
      %91 = sbr.rel (0) target = $region33
    $region32: #{tpu_custom_call.1} parent=1 // pred_region
      _
    $region33: #{tpu_custom_call.1} parent=1 // pred_fallthru
      _
    // Predicated region
    $region34: #{tpu_custom_call.1} parent=1 // pred_check
      _
    $region35: #{tpu_custom_call.1} parent=1 // pred_check_branch
      %93 = sbr.rel (0) target = $region37
    $region36: #{tpu_custom_call.1} parent=1 // pred_region
      _
    $region37: #{tpu_custom_call.1} parent=1 // pred_fallthru
      _
    // Predicated region
    $region38: #{tpu_custom_call.1} parent=1 // pred_check
      _
    $region39: #{tpu_custom_call.1} parent=1 // pred_check_branch
      %95 = sbr.rel (0) target = $region41
    $region40: #{tpu_custom_call.1} parent=1 // pred_region
      _
    $region41: #{tpu_custom_call.1} parent=1 // pred_fallthru
      _
    // Predicated region
    $region42: #{tpu_custom_call.1} parent=1 // pred_check
      _
    $region43: #{tpu_custom_call.1} parent=1 // pred_check_branch
      %97 = sbr.rel (0) target = $region45
    $region44: #{tpu_custom_call.1} parent=1 // pred_region
      %s99 = ssub.s32 12288, 12288
      %100 = vsyncadd [#allocation16], %s99
      %s101 = sshll.u32 [#allocation15], 4
      %s102 = int_to_ptr.vmem [resolvable:$true] %s101
      %107 = dma.hbm_to_vmem [thread:$0]  %s10, 12288, %s102, [#allocation16], 256, 256, 16
    $region45: #{tpu_custom_call.1} parent=1 // pred_fallthru
      _
    // Predicated region
    $region46: #{tpu_custom_call.1} parent=1 // pred_check
      _
    $region47: #{tpu_custom_call.1} parent=1 // pred_check_branch
      %109 = sbr.rel (0) target = $region49
    $region48: #{tpu_custom_call.1} parent=1 // pred_region
      _
    $region49: #{tpu_custom_call.1} parent=1 // pred_fallthru
      _
    // Predicated region
    $region50: #{tpu_custom_call.1} parent=1 // pred_check
      _
    $region51: #{tpu_custom_call.1} parent=1 // pred_check_branch
      %111 = sbr.rel (0) target = $region53
    $region52: #{tpu_custom_call.1} parent=1 // pred_region
      %s113 = ssub.s32 2048, 2048
      %114 = vsyncadd [#allocation16], %s113
      %s115 = sshll.u32 [#allocation17], 4
      %s116 = int_to_ptr.vmem [resolvable:$true] %s115
      %121 = dma.hbm_to_vmem [thread:$0]  %s12, 2048, %s116, [#allocation16], 128, 128, 8
    $region53: #{tpu_custom_call.1} parent=1 // pred_fallthru
      _
    // Predicated region
    $region54: #{tpu_custom_call.1} parent=1 // pred_check
      _
    $region55: #{tpu_custom_call.1} parent=1 // pred_check_branch
      %123 = sbr.rel (0) target = $region57
    $region56: #{tpu_custom_call.1} parent=1 // pred_region
      _
    $region57: #{tpu_custom_call.1} parent=1 // pred_fallthru
      _
    // Predicated region
    $region58: #{tpu_custom_call.1} parent=1 // pred_check
      _
    $region59: #{tpu_custom_call.1} parent=1 // pred_check_branch
      %125 = sbr.rel (0) target = $region61
    $region60: #{tpu_custom_call.1} parent=1 // pred_region
      %126 = dma.done [#allocation7], 768
    $region61: #{tpu_custom_call.1} parent=1 // pred_fallthru
      _
    // Predicated region
    $region62: #{tpu_custom_call.1} parent=1 // pred_check
      _
    $region63: #{tpu_custom_call.1} parent=1 // pred_check_branch
      %128 = sbr.rel (0) target = $region65
    $region64: #{tpu_custom_call.1} parent=1 // pred_region
      %129 = dma.done [#allocation10], 256
    $region65: #{tpu_custom_call.1} parent=1 // pred_fallthru
      _
    // Predicated region
    $region66: #{tpu_custom_call.1} parent=1 // pred_check
      _
    $region67: #{tpu_custom_call.1} parent=1 // pred_check_branch
      %131 = sbr.rel (0) target = $region69
    $region68: #{tpu_custom_call.1} parent=1 // pred_region
      %132 = dma.done [#allocation10], 256
    $region69: #{tpu_custom_call.1} parent=1 // pred_fallthru
      _
    // Predicated region
    $region70: #{tpu_custom_call.1} parent=1 // pred_check
      _
    $region71: #{tpu_custom_call.1} parent=1 // pred_check_branch
      %134 = sbr.rel (0) target = $region73
    $region72: #{tpu_custom_call.1} parent=1 // pred_region
      %135 = dma.done [#allocation13], 8192
    $region73: #{tpu_custom_call.1} parent=1 // pred_fallthru
      _
    // Predicated region
    $region74: #{tpu_custom_call.1} parent=1 // pred_check
      _
    $region75: #{tpu_custom_call.1} parent=1 // pred_check_branch
      %137 = sbr.rel (0) target = $region77
    $region76: #{tpu_custom_call.1} parent=1 // pred_region
      %138 = dma.done [#allocation13], 1024
    $region77: #{tpu_custom_call.1} parent=1 // pred_fallthru
      _
    // Predicated region
    $region78: #{tpu_custom_call.1} parent=1 // pred_check
      _
    $region79: #{tpu_custom_call.1} parent=1 // pred_check_branch
      %140 = sbr.rel (0) target = $region81
    $region80: #{tpu_custom_call.1} parent=1 // pred_region
      %141 = dma.done [#allocation16], 12288
    $region81: #{tpu_custom_call.1} parent=1 // pred_fallthru
      _
    // Predicated region
    $region82: #{tpu_custom_call.1} parent=1 // pred_check
      _
    $region83: #{tpu_custom_call.1} parent=1 // pred_check_branch
      %143 = sbr.rel (0) target = $region85
    $region84: #{tpu_custom_call.1} parent=1 // pred_region
      %144 = dma.done [#allocation16], 2048
    $region85: #{tpu_custom_call.1} parent=1 // pred_fallthru
      _
    %146 = vst [vmem:[#allocation2] sm:$0x3f] 0.0
    %147 = vst [vmem:[#allocation3] sm:$0x3] 0.0
    %148 = vst [vmem:[#allocation4] sm:$0x3] 0.0
    loop: start=0, step=1, limit=6
    $region86: #{tpu_custom_call.1} parent=1 // loop_pre_header
      _
    $region87: #{tpu_custom_call.1} parent=1 // loop_header
      %s150 = sphi 0, %s154
      %p151 = scmp.ge.s32.totalorder %s150, 6
    $region88: #{tpu_custom_call.1} parent=1 // loop_header_branch
      %153 = sbr.rel (%p151) target = $region92
    $region89: #{tpu_custom_call.1} parent=1 // loop_body
      %s155 = smul.u32 %s150, 4
      %s156 = smul.addr %s155, 2
      %s157 = scalar_lea.vmem [#allocation6], %s156
      %v158 = vld [vmem:[%s157] sm:$0xff]
      %s159 = scalar_lea.vmem %s1, %s150
      %v160 = vld [vmem:[%s159] sm:$0x1]
      %v161 = vunpack.c.l.bf16 %v160
      %v162 = vld [vmem:[#allocation3] sm:$0x3]
      %v163 = vld [vmem:[#allocation4] sm:$0x3]
      %v164 = vld [vmem:[#allocation2 + $0x2] sm:$0xf]
      %v167 = vunpack.c.l.s4 1983009808
      %v168 = vunpack.c.0.s8 %v167
      %v169 = vlaneseq
      %v170 = vshrl.u32 %v169, 7
      %v171 = vsub.s32 %v168, %v170
      %v172 = vrot.slane %v164, %v171
      %v173 = vcombine.high %v172, %v172
      %v176 = vpack.c.bf16 %v172, %v172
      %v177 = vpack.c.bf16 %v173, %v173
      %v178 = vld [vmem:[#allocation12] sm:$0xff]
      %v179 = vld [vmem:[#allocation12 + $0x8] sm:$0xff]
      %v180 = vld [vmem:[#allocation12 + $0x10] sm:$0xff]
      %v181 = vld [vmem:[#allocation12 + $0x18] sm:$0xff]
      %v182 = vld [vmem:[#allocation12 + $0x20] sm:$0xff]
      %v183 = vld [vmem:[#allocation12 + $0x28] sm:$0xff]
      %v184 = vld [vmem:[#allocation12 + $0x30] sm:$0xff]
      %v185 = vld [vmem:[#allocation12 + $0x38] sm:$0xff]
      %v186 = vld [vmem:[#allocation12 + $0x40] sm:$0xff]
      %v187 = vld [vmem:[#allocation12 + $0x48] sm:$0xff]
      %v188 = vld [vmem:[#allocation12 + $0x50] sm:$0xff]
      %v189 = vld [vmem:[#allocation12 + $0x58] sm:$0xff]
      %v190 = vld [vmem:[#allocation12 + $0x60] sm:$0xff]
      %v191 = vld [vmem:[#allocation12 + $0x68] sm:$0xff]
      %v192 = vld [vmem:[#allocation12 + $0x70] sm:$0xff]
      %v193 = vld [vmem:[#allocation12 + $0x78] sm:$0xff]
      %v194 = vld [vmem:[#allocation12 + $0x80] sm:$0xff]
      %v195 = vld [vmem:[#allocation12 + $0x88] sm:$0xff]
      %v196 = vld [vmem:[#allocation12 + $0x90] sm:$0xff]
      %v197 = vld [vmem:[#allocation12 + $0x98] sm:$0xff]
      %v198 = vld [vmem:[#allocation12 + $0xa0] sm:$0xff]
      %v199 = vld [vmem:[#allocation12 + $0xa8] sm:$0xff]
      %v200 = vld [vmem:[#allocation12 + $0xb0] sm:$0xff]
      %v201 = vld [vmem:[#allocation12 + $0xb8] sm:$0xff]
      %v202 = vld [vmem:[#allocation12 + $0xc0] sm:$0xff]
      %v203 = vld [vmem:[#allocation12 + $0xc8] sm:$0xff]
      %v204 = vld [vmem:[#allocation12 + $0xd0] sm:$0xff]
      %v205 = vld [vmem:[#allocation12 + $0xd8] sm:$0xff]
      %v206 = vld [vmem:[#allocation12 + $0xe0] sm:$0xff]
      %v207 = vld [vmem:[#allocation12 + $0xe8] sm:$0xff]
      %v208 = vld [vmem:[#allocation12 + $0xf0] sm:$0xff]
      %v209 = vld [vmem:[#allocation12 + $0xf8] sm:$0xff]
      %v210 = vld [vmem:[#allocation12 + $0x100] sm:$0xff]
      %v211 = vld [vmem:[#allocation12 + $0x108] sm:$0xff]
      %v212 = vld [vmem:[#allocation12 + $0x110] sm:$0xff]
      %v213 = vld [vmem:[#allocation12 + $0x118] sm:$0xff]
      %v214 = vld [vmem:[#allocation12 + $0x120] sm:$0xff]
      %v215 = vld [vmem:[#allocation12 + $0x128] sm:$0xff]
      %v216 = vld [vmem:[#allocation12 + $0x130] sm:$0xff]
      %v217 = vld [vmem:[#allocation12 + $0x138] sm:$0xff]
      %v218 = vld [vmem:[#allocation12 + $0x140] sm:$0xff]
      %v219 = vld [vmem:[#allocation12 + $0x148] sm:$0xff]
      %v220 = vld [vmem:[#allocation12 + $0x150] sm:$0xff]
      %v221 = vld [vmem:[#allocation12 + $0x158] sm:$0xff]
      %v222 = vld [vmem:[#allocation12 + $0x160] sm:$0xff]
      %v223 = vld [vmem:[#allocation12 + $0x168] sm:$0xff]
      %v224 = vld [vmem:[#allocation12 + $0x170] sm:$0xff]
      %v225 = vld [vmem:[#allocation12 + $0x178] sm:$0xff]
      %v226 = vld [vmem:[#allocation12 + $0x180] sm:$0xff]
      %v227 = vld [vmem:[#allocation12 + $0x188] sm:$0xff]
      %v228 = vld [vmem:[#allocation12 + $0x190] sm:$0xff]
      %v229 = vld [vmem:[#allocation12 + $0x198] sm:$0xff]
      %v230 = vld [vmem:[#allocation12 + $0x1a0] sm:$0xff]
      %v231 = vld [vmem:[#allocation12 + $0x1a8] sm:$0xff]
      %v232 = vld [vmem:[#allocation12 + $0x1b0] sm:$0xff]
      %v233 = vld [vmem:[#allocation12 + $0x1b8] sm:$0xff]
      %v234 = vld [vmem:[#allocation12 + $0x1c0] sm:$0xff]
      %v235 = vld [vmem:[#allocation12 + $0x1c8] sm:$0xff]
      %v236 = vld [vmem:[#allocation12 + $0x1d0] sm:$0xff]
      %v237 = vld [vmem:[#allocation12 + $0x1d8] sm:$0xff]
      %v238 = vld [vmem:[#allocation12 + $0x1e0] sm:$0xff]
      %v239 = vld [vmem:[#allocation12 + $0x1e8] sm:$0xff]
      %v240 = vld [vmem:[#allocation12 + $0x1f0] sm:$0xff]
      %v241 = vld [vmem:[#allocation12 + $0x1f8] sm:$0xff]
      %v242 = vld [vmem:[%s4] sm:$0xff]
      %v307 = vunpack.c.l.b16 %v178
      %v308 = vunpack.c.h.b16 %v178
      %v309 = vunpack.c.l.b16 %v179
      %v310 = vunpack.c.h.b16 %v179
      %v311 = vunpack.c.l.b16 %v180
      %v312 = vunpack.c.h.b16 %v180
      %v313 = vunpack.c.l.b16 %v181
      %v314 = vunpack.c.h.b16 %v181
      %v315 = vunpack.c.l.b16 %v182
      %v316 = vunpack.c.h.b16 %v182
      %v317 = vunpack.c.l.b16 %v183
      %v318 = vunpack.c.h.b16 %v183
      %v319 = vunpack.c.l.b16 %v184
      %v320 = vunpack.c.h.b16 %v184
      %v321 = vunpack.c.l.b16 %v185
      %v322 = vunpack.c.h.b16 %v185
      %v323 = vunpack.c.l.b16 %v186
      %v324 = vunpack.c.h.b16 %v186
      %v325 = vunpack.c.l.b16 %v187
      %v326 = vunpack.c.h.b16 %v187
      %v327 = vunpack.c.l.b16 %v188
      %v328 = vunpack.c.h.b16 %v188
      %v329 = vunpack.c.l.b16 %v189
      %v330 = vunpack.c.h.b16 %v189
      %v331 = vunpack.c.l.b16 %v190
      %v332 = vunpack.c.h.b16 %v190
      %v333 = vunpack.c.l.b16 %v191
      %v334 = vunpack.c.h.b16 %v191
      %v335 = vunpack.c.l.b16 %v192
      %v336 = vunpack.c.h.b16 %v192
      %v337 = vunpack.c.l.b16 %v193
      %v338 = vunpack.c.h.b16 %v193
      %v339 = vunpack.c.l.b16 %v194
      %v340 = vunpack.c.h.b16 %v194
      %v341 = vunpack.c.l.b16 %v195
      %v342 = vunpack.c.h.b16 %v195
      %v343 = vunpack.c.l.b16 %v196
      %v344 = vunpack.c.h.b16 %v196
      %v345 = vunpack.c.l.b16 %v197
      %v346 = vunpack.c.h.b16 %v197
      %v347 = vunpack.c.l.b16 %v198
      %v348 = vunpack.c.h.b16 %v198
      %v349 = vunpack.c.l.b16 %v199
      %v350 = vunpack.c.h.b16 %v199
      %v351 = vunpack.c.l.b16 %v200
      %v352 = vunpack.c.h.b16 %v200
      %v353 = vunpack.c.l.b16 %v201
      %v354 = vunpack.c.h.b16 %v201
      %v355 = vunpack.c.l.b16 %v202
      %v356 = vunpack.c.h.b16 %v202
      %v357 = vunpack.c.l.b16 %v203
      %v358 = vunpack.c.h.b16 %v203
      %v359 = vunpack.c.l.b16 %v204
      %v360 = vunpack.c.h.b16 %v204
      %v361 = vunpack.c.l.b16 %v205
      %v362 = vunpack.c.h.b16 %v205
      %v363 = vunpack.c.l.b16 %v206
      %v364 = vunpack.c.h.b16 %v206
      %v365 = vunpack.c.l.b16 %v207
      %v366 = vunpack.c.h.b16 %v207
      %v367 = vunpack.c.l.b16 %v208
      %v368 = vunpack.c.h.b16 %v208
      %v369 = vunpack.c.l.b16 %v209
      %v370 = vunpack.c.h.b16 %v209
      %v371 = vunpack.c.l.b16 %v210
      %v372 = vunpack.c.h.b16 %v210
      %v373 = vunpack.c.l.b16 %v211
      %v374 = vunpack.c.h.b16 %v211
      %v375 = vunpack.c.l.b16 %v212
      %v376 = vunpack.c.h.b16 %v212
      %v377 = vunpack.c.l.b16 %v213
      %v378 = vunpack.c.h.b16 %v213
      %v379 = vunpack.c.l.b16 %v214
      %v380 = vunpack.c.h.b16 %v214
      %v381 = vunpack.c.l.b16 %v215
      %v382 = vunpack.c.h.b16 %v215
      %v383 = vunpack.c.l.b16 %v216
      %v384 = vunpack.c.h.b16 %v216
      %v385 = vunpack.c.l.b16 %v217
      %v386 = vunpack.c.h.b16 %v217
      %v387 = vunpack.c.l.b16 %v218
      %v388 = vunpack.c.h.b16 %v218
      %v389 = vunpack.c.l.b16 %v219
      %v390 = vunpack.c.h.b16 %v219
      %v391 = vunpack.c.l.b16 %v220
      %v392 = vunpack.c.h.b16 %v220
      %v393 = vunpack.c.l.b16 %v221
      %v394 = vunpack.c.h.b16 %v221
      %v395 = vunpack.c.l.b16 %v222
      %v396 = vunpack.c.h.b16 %v222
      %v397 = vunpack.c.l.b16 %v223
      %v398 = vunpack.c.h.b16 %v223
      %v399 = vunpack.c.l.b16 %v224
      %v400 = vunpack.c.h.b16 %v224
      %v401 = vunpack.c.l.b16 %v225
      %v402 = vunpack.c.h.b16 %v225
      %v403 = vunpack.c.l.b16 %v226
      %v404 = vunpack.c.h.b16 %v226
      %v405 = vunpack.c.l.b16 %v227
      %v406 = vunpack.c.h.b16 %v227
      %v407 = vunpack.c.l.b16 %v228
      %v408 = vunpack.c.h.b16 %v228
      %v409 = vunpack.c.l.b16 %v229
      %v410 = vunpack.c.h.b16 %v229
      %v411 = vunpack.c.l.b16 %v230
      %v412 = vunpack.c.h.b16 %v230
      %v413 = vunpack.c.l.b16 %v231
      %v414 = vunpack.c.h.b16 %v231
      %v415 = vunpack.c.l.b16 %v232
      %v416 = vunpack.c.h.b16 %v232
      %v417 = vunpack.c.l.b16 %v233
      %v418 = vunpack.c.h.b16 %v233
      %v419 = vunpack.c.l.b16 %v234
      %v420 = vunpack.c.h.b16 %v234
      %v421 = vunpack.c.l.b16 %v235
      %v422 = vunpack.c.h.b16 %v235
      %v423 = vunpack.c.l.b16 %v236
      %v424 = vunpack.c.h.b16 %v236
      %v425 = vunpack.c.l.b16 %v237
      %v426 = vunpack.c.h.b16 %v237
      %v427 = vunpack.c.l.b16 %v238
      %v428 = vunpack.c.h.b16 %v238
      %v429 = vunpack.c.l.b16 %v239
      %v430 = vunpack.c.h.b16 %v239
      %v431 = vunpack.c.l.b16 %v240
      %v432 = vunpack.c.h.b16 %v240
      %v433 = vunpack.c.l.b16 %v241
      %v434 = vunpack.c.h.b16 %v241
      %v435 = vpack.c.b16 %v311, %v307
      %v436 = vpack.c.b16 %v312, %v308
      %v437 = vpack.c.b16 %v313, %v309
      %v438 = vpack.c.b16 %v314, %v310
      %v439 = vpack.c.b16 %v319, %v315
      %v440 = vpack.c.b16 %v320, %v316
      %v441 = vpack.c.b16 %v321, %v317
      %v442 = vpack.c.b16 %v322, %v318
      %v443 = vpack.c.b16 %v327, %v323
      %v444 = vpack.c.b16 %v328, %v324
      %v445 = vpack.c.b16 %v329, %v325
      %v446 = vpack.c.b16 %v330, %v326
      %v447 = vpack.c.b16 %v335, %v331
      %v448 = vpack.c.b16 %v336, %v332
      %v449 = vpack.c.b16 %v337, %v333
      %v450 = vpack.c.b16 %v338, %v334
      %v451 = vpack.c.b16 %v343, %v339
      %v452 = vpack.c.b16 %v344, %v340
      %v453 = vpack.c.b16 %v345, %v341
      %v454 = vpack.c.b16 %v346, %v342
      %v455 = vpack.c.b16 %v351, %v347
      %v456 = vpack.c.b16 %v352, %v348
      %v457 = vpack.c.b16 %v353, %v349
      %v458 = vpack.c.b16 %v354, %v350
      %v459 = vpack.c.b16 %v359, %v355
      %v460 = vpack.c.b16 %v360, %v356
      %v461 = vpack.c.b16 %v361, %v357
      %v462 = vpack.c.b16 %v362, %v358
      %v463 = vpack.c.b16 %v367, %v363
      %v464 = vpack.c.b16 %v368, %v364
      %v465 = vpack.c.b16 %v369, %v365
      %v466 = vpack.c.b16 %v370, %v366
      %v467 = vpack.c.b16 %v375, %v371
      %v468 = vpack.c.b16 %v376, %v372
      %v469 = vpack.c.b16 %v377, %v373
      %v470 = vpack.c.b16 %v378, %v374
      %v471 = vpack.c.b16 %v383, %v379
      %v472 = vpack.c.b16 %v384, %v380
      %v473 = vpack.c.b16 %v385, %v381
      %v474 = vpack.c.b16 %v386, %v382
      %v475 = vpack.c.b16 %v391, %v387
      %v476 = vpack.c.b16 %v392, %v388
      %v477 = vpack.c.b16 %v393, %v389
      %v478 = vpack.c.b16 %v394, %v390
      %v479 = vpack.c.b16 %v399, %v395
      %v480 = vpack.c.b16 %v400, %v396
      %v481 = vpack.c.b16 %v401, %v397
      %v482 = vpack.c.b16 %v402, %v398
      %v483 = vpack.c.b16 %v407, %v403
      %v484 = vpack.c.b16 %v408, %v404
      %v485 = vpack.c.b16 %v409, %v405
      %v486 = vpack.c.b16 %v410, %v406
      %v487 = vpack.c.b16 %v415, %v411
      %v488 = vpack.c.b16 %v416, %v412
      %v489 = vpack.c.b16 %v417, %v413
      %v490 = vpack.c.b16 %v418, %v414
      %v491 = vpack.c.b16 %v423, %v419
      %v492 = vpack.c.b16 %v424, %v420
      %v493 = vpack.c.b16 %v425, %v421
      %v494 = vpack.c.b16 %v426, %v422
      %v495 = vpack.c.b16 %v431, %v427
      %v496 = vpack.c.b16 %v432, %v428
      %v497 = vpack.c.b16 %v433, %v429
      %v498 = vpack.c.b16 %v434, %v430
      %v564 = vcombine.high %v242, %v242
      %v566 = vunpack.c.l.s4 1983009808
      %v567 = vunpack.c.0.s8 %v566
      %v568 = vlaneseq
      %v569 = vshrl.u32 %v568, 7
      %v570 = vsub.s32 %v567, %v569
      %v571 = vrot.slane %v242, %v570
      %v573 = vunpack.c.l.s4 1983009808
      %v574 = vunpack.c.0.s8 %v573
      %v575 = vlaneseq
      %v576 = vshrl.u32 %v575, 7
      %v577 = vsub.s32 %v574, %v576
      %v578 = vrot.slane %v564, %v577
      %v579 = vcombine.high %v571, %v571
      %v580 = vcombine.high %v578, %v578
      %585 = vmatprep.subr.bf16.mxu0 %v436
      %586 = vmatpush1.bf16.msra.mxu0 %v435
      %587 = vmatprep.subr.bf16.mxu0 %v440
      %588 = vmatpush1.bf16.msra.mxu0 %v439
      %589 = vmatprep.subr.bf16.mxu0 %v444
      %590 = vmatpush1.bf16.msra.mxu0 %v443
      %591 = vmatprep.subr.bf16.mxu0 %v448
      %592 = vmatpush1.bf16.msra.mxu0 %v447
      %593 = vmatprep.subr.bf16.mxu0 %v452
      %594 = vmatpush1.bf16.msra.mxu0 %v451
      %595 = vmatprep.subr.bf16.mxu0 %v456
      %596 = vmatpush1.bf16.msra.mxu0 %v455
      %597 = vmatprep.subr.bf16.mxu0 %v460
      %598 = vmatpush1.bf16.msra.mxu0 %v459
      %599 = vmatprep.subr.bf16.mxu0 %v464
      %600 = vmatpush1.bf16.msra.mxu0 %v463
      %601 = vmatprep.subr.bf16.mxu0 %v468
      %602 = vmatpush1.bf16.msra.mxu0 %v467
      %603 = vmatprep.subr.bf16.mxu0 %v472
      %604 = vmatpush1.bf16.msra.mxu0 %v471
      %605 = vmatprep.subr.bf16.mxu0 %v476
      %606 = vmatpush1.bf16.msra.mxu0 %v475
      %607 = vmatprep.subr.bf16.mxu0 %v480
      %608 = vmatpush1.bf16.msra.mxu0 %v479
      %609 = vmatprep.subr.bf16.mxu0 %v484
      %610 = vmatpush1.bf16.msra.mxu0 %v483
      %611 = vmatprep.subr.bf16.mxu0 %v488
      %612 = vmatpush1.bf16.msra.mxu0 %v487
      %613 = vmatprep.subr.bf16.mxu0 %v492
      %614 = vmatpush1.bf16.msra.mxu0 %v491
      %615 = vmatprep.subr.bf16.mxu0 %v496
      %616 = vmatpush1.bf16.msra.mxu0 %v495
      %617 = vmatprep.mubr.bf16.mxu0 %v177
      %618 = vmatmul.mubr.bf16.gmra.mrb[0].mxu0 %v176
      %v619 = vpop.f32.mrb[0].mxu0
      %v620 = vadd.f32 %v571, %v619
      %v621 = vpop.f32.mrb[0].mxu0
      %v622 = vadd.f32 %v579, %v621
      %v623 = vpop.f32.mrb[0].mxu0
      %v624 = vpop.f32.mrb[0].mxu0
      %625 = vdwg.mxu0
      %626 = vmatprep.subr.bf16.mxu0 %v438
      %627 = vmatpush1.bf16.msra.mxu0 %v437
      %628 = vmatprep.subr.bf16.mxu0 %v442
      %629 = vmatpush1.bf16.msra.mxu0 %v441
      %630 = vmatprep.subr.bf16.mxu0 %v446
      %631 = vmatpush1.bf16.msra.mxu0 %v445
      %632 = vmatprep.subr.bf16.mxu0 %v450
      %633 = vmatpush1.bf16.msra.mxu0 %v449
      %634 = vmatprep.subr.bf16.mxu0 %v454
      %635 = vmatpush1.bf16.msra.mxu0 %v453
      %636 = vmatprep.subr.bf16.mxu0 %v458
      %637 = vmatpush1.bf16.msra.mxu0 %v457
      %638 = vmatprep.subr.bf16.mxu0 %v462
      %639 = vmatpush1.bf16.msra.mxu0 %v461
      %640 = vmatprep.subr.bf16.mxu0 %v466
      %641 = vmatpush1.bf16.msra.mxu0 %v465
      %642 = vmatprep.subr.bf16.mxu0 %v470
      %643 = vmatpush1.bf16.msra.mxu0 %v469
      %644 = vmatprep.subr.bf16.mxu0 %v474
      %645 = vmatpush1.bf16.msra.mxu0 %v473
      %646 = vmatprep.subr.bf16.mxu0 %v478
      %647 = vmatpush1.bf16.msra.mxu0 %v477
      %648 = vmatprep.subr.bf16.mxu0 %v482
      %649 = vmatpush1.bf16.msra.mxu0 %v481
      %650 = vmatprep.subr.bf16.mxu0 %v486
      %651 = vmatpush1.bf16.msra.mxu0 %v485
      %652 = vmatprep.subr.bf16.mxu0 %v490
      %653 = vmatpush1.bf16.msra.mxu0 %v489
      %654 = vmatprep.subr.bf16.mxu0 %v494
      %655 = vmatpush1.bf16.msra.mxu0 %v493
      %656 = vmatprep.subr.bf16.mxu0 %v498
      %657 = vmatpush1.bf16.msra.mxu0 %v497
      %658 = vmatprep.mubr.bf16.mxu0 %v177
      %659 = vmatmul.mubr.bf16.gmra.mrb[0].mxu0 %v176
      %v660 = vpop.f32.mrb[0].mxu0
      %v661 = vadd.f32 %v578, %v660
      %v662 = vpop.f32.mrb[0].mxu0
      %v663 = vadd.f32 %v580, %v662
      %v664 = vpop.f32.mrb[0].mxu0
      %v665 = vpop.f32.mrb[0].mxu0
      %666 = vdwg.mxu0
      %v668 = vcombine.high %v158, %v158
      %v670 = vunpack.c.l.s4 1983009808
      %v671 = vunpack.c.0.s8 %v670
      %v672 = vlaneseq
      %v673 = vshrl.u32 %v672, 7
      %v674 = vsub.s32 %v671, %v673
      %v675 = vrot.slane %v158, %v674
      %v677 = vunpack.c.l.s4 1983009808
      %v678 = vunpack.c.0.s8 %v677
      %v679 = vlaneseq
      %v680 = vshrl.u32 %v679, 7
      %v681 = vsub.s32 %v678, %v680
      %v682 = vrot.slane %v668, %v681
      %v683 = vcombine.high %v675, %v675
      %v684 = vcombine.high %v682, %v682
      %v689 = vadd.f32 %v620, %v675
      %v690 = vadd.f32 %v622, %v683
      %v691 = vadd.f32 %v661, %v682
      %v692 = vadd.f32 %v663, %v684
      %v693 = vmul.f32 %v689, 0.5
      %v694 = vtanh.pop %v693
      %v695 = vadd.f32 %v694, 1.0
      %v696 = vmul.f32 %v695, 0.5
      %v697 = vmul.f32 %v690, 0.5
      %v698 = vtanh.pop %v697
      %v699 = vadd.f32 %v698, 1.0
      %v700 = vmul.f32 %v699, 0.5
      %v701 = vtanh.pop %v691
      %v702 = vmul.f32 %v692, 0.5
      %v703 = vtanh.pop %v702
      %v704 = vadd.f32 %v703, 1.0
      %v705 = vmul.f32 %v704, 0.5
      %v706 = vmul.f32 %v700, %v162
      %v707 = vmul.f32 %v696, %v701
      %v708 = vadd.f32 %v706, %v707
      %v709 = vtanh.pop %v708
      %v710 = vmul.f32 %v705, %v709
      %711 = vst [vmem:[#allocation2 + $0x2] sm:$0x3] %v710
      %712 = vst [vmem:[#allocation3] sm:$0x3] %v708
      %v713 = vpack.c.bf16 %v710, %v710
      %v714 = vld [vmem:[#allocation14] sm:$0xf]
      %v715 = vld [vmem:[#allocation14 + $0x4] sm:$0xf]
      %v716 = vld [vmem:[#allocation14 + $0x8] sm:$0xf]
      %v717 = vld [vmem:[#allocation14 + $0xc] sm:$0xf]
      %v718 = vld [vmem:[#allocation14 + $0x10] sm:$0xf]
      %v719 = vld [vmem:[#allocation14 + $0x14] sm:$0xf]
      %v720 = vld [vmem:[#allocation14 + $0x18] sm:$0xf]
      %v721 = vld [vmem:[#allocation14 + $0x1c] sm:$0xf]
      %v722 = vld [vmem:[#allocation14 + $0x20] sm:$0xf]
      %v723 = vld [vmem:[#allocation14 + $0x24] sm:$0xf]
      %v724 = vld [vmem:[#allocation14 + $0x28] sm:$0xf]
      %v725 = vld [vmem:[#allocation14 + $0x2c] sm:$0xf]
      %v726 = vld [vmem:[#allocation14 + $0x30] sm:$0xf]
      %v727 = vld [vmem:[#allocation14 + $0x34] sm:$0xf]
      %v728 = vld [vmem:[#allocation14 + $0x38] sm:$0xf]
      %v729 = vld [vmem:[#allocation14 + $0x3c] sm:$0xf]
      %v730 = vld [vmem:[%s7] sm:$0x1]
      %v732 = vlaneseq
      %v733 = vshrl.u32 %v732, 7
      %v734 = vsub.s32 0, %v733
      %v735 = vrot.slane %v730, %v734
      %v753 = vunpack.c.l.b16 %v714
      %v754 = vunpack.c.l.b16 %v715
      %v755 = vunpack.c.l.b16 %v716
      %v756 = vunpack.c.l.b16 %v717
      %v757 = vunpack.c.l.b16 %v718
      %v758 = vunpack.c.l.b16 %v719
      %v759 = vunpack.c.l.b16 %v720
      %v760 = vunpack.c.l.b16 %v721
      %v761 = vunpack.c.l.b16 %v722
      %v762 = vunpack.c.l.b16 %v723
      %v763 = vunpack.c.l.b16 %v724
      %v764 = vunpack.c.l.b16 %v725
      %v765 = vunpack.c.l.b16 %v726
      %v766 = vunpack.c.l.b16 %v727
      %v767 = vunpack.c.l.b16 %v728
      %v768 = vunpack.c.l.b16 %v729
      %v769 = vpack.c.b16 %v754, %v753
      %v770 = vpack.c.b16 %v756, %v755
      %v771 = vpack.c.b16 %v758, %v757
      %v772 = vpack.c.b16 %v760, %v759
      %v773 = vpack.c.b16 %v762, %v761
      %v774 = vpack.c.b16 %v764, %v763
      %v775 = vpack.c.b16 %v766, %v765
      %v776 = vpack.c.b16 %v768, %v767
      %785 = vmatprep.subr.bf16.mxu0 0
      %786 = vmatpush1.bf16.msra.mxu0 %v769
      %787 = vmatprep.subr.bf16.mxu0 0
      %788 = vmatpush1.bf16.msra.mxu0 %v770
      %789 = vmatprep.subr.bf16.mxu0 0
      %790 = vmatpush1.bf16.msra.mxu0 %v771
      %791 = vmatprep.subr.bf16.mxu0 0
      %792 = vmatpush1.bf16.msra.mxu0 %v772
      %793 = vmatprep.subr.bf16.mxu0 0
      %794 = vmatpush1.bf16.msra.mxu0 %v773
      %795 = vmatprep.subr.bf16.mxu0 0
      %796 = vmatpush1.bf16.msra.mxu0 %v774
      %797 = vmatprep.subr.bf16.mxu0 0
      %798 = vmatpush1.bf16.msra.mxu0 %v775
      %799 = vmatprep.subr.bf16.mxu0 0
      %800 = vmatpush1.bf16.msra.mxu0 %v776
      %801 = vmatprep.subr.bf16.mxu0 0
      %802 = vmatpush1.bf16.msra.mxu0 0
      %803 = vmatprep.subr.bf16.mxu0 0
      %804 = vmatpush1.bf16.msra.mxu0 0
      %805 = vmatprep.subr.bf16.mxu0 0
      %806 = vmatpush1.bf16.msra.mxu0 0
      %807 = vmatprep.subr.bf16.mxu0 0
      %808 = vmatpush1.bf16.msra.mxu0 0
      %809 = vmatprep.subr.bf16.mxu0 0
      %810 = vmatpush1.bf16.msra.mxu0 0
      %811 = vmatprep.subr.bf16.mxu0 0
      %812 = vmatpush1.bf16.msra.mxu0 0
      %813 = vmatprep.subr.bf16.mxu0 0
      %814 = vmatpush1.bf16.msra.mxu0 0
      %815 = vmatprep.subr.bf16.mxu0 0
      %816 = vmatpush1.bf16.msra.mxu0 0
      %817 = vmatprep.mubr.bf16.mxu0 0
      %818 = vmatmul.mubr.bf16.gmra.mrb[0].mxu0 %v713
      %v819 = vpop.f32.mrb[0].mxu0
      %v820 = vadd.f32 %v735, %v819
      %v821 = vpop.f32.mrb[0].mxu0
      %v822 = vpop.f32.mrb[0].mxu0
      %v823 = vpop.f32.mrb[0].mxu0
      %824 = vdwg.mxu0
      %v825 = vld [vmem:[#allocation11] sm:$0xff]
      %v826 = vld [vmem:[#allocation11 + $0x8] sm:$0xff]
      %v829 = vunpack.c.l.s4 1966171168
      %v830 = vunpack.c.0.s8 %v829
      %v831 = vlaneseq
      %v832 = vshrl.u32 %v831, 7
      %v833 = vsub.s32 %v830, %v832
      %v834 = vrot.slane %v820, %v833
      %v835 = vcombine.high %v834, %v834
      %v837 = vunpack.c.l.s4 1966171168
      %v838 = vunpack.c.0.s8 %v837
      %v839 = vlaneseq
      %v840 = vshrl.u32 %v839, 7
      %v841 = vsub.s32 %v838, %v840
      %v842 = vrot.slane %v834, %v841
      %v844 = vunpack.c.l.s4 1966171168
      %v845 = vunpack.c.0.s8 %v844
      %v846 = vlaneseq
      %v847 = vshrl.u32 %v846, 7
      %v848 = vsub.s32 %v845, %v847
      %v849 = vrot.slane %v835, %v848
      %v850 = vlaneseq
      %v851 = vshrl.u32 %v850, 7
      %v852 = vsub.s32 0, %v851
      %v853 = vrot.slane %v842, %v852
      %v854 = vlaneseq
      %v855 = vshrl.u32 %v854, 7
      %v856 = vsub.s32 0, %v855
      %v857 = vrot.slane %v849, %v856
      %v860 = vadd.f32 %v825, %v853
      %v861 = vadd.f32 %v826, %v857
      %v862 = vtanh.pop %v860
      %v863 = vtanh.pop %v861
      %v864 = vld [vmem:[%s8] sm:$0x1]
      %v866 = vlaneseq
      %v867 = vshrl.u32 %v866, 7
      %v868 = vsub.s32 0, %v867
      %v869 = vrot.slane %v864, %v868
      %v871 = vmul.f32 %v862, %v869
      %v872 = vmul.f32 %v863, %v869
      %873 = vadd.xlane.f32.xlu0 %v871
      %v874 = vpop.xlane.xlu0 %873
      %875 = vadd.xlane.f32.xlu0 %v872
      %v876 = vpop.xlane.xlu0 %875
      %v877 = vld [vmem:[#allocation5] sm:$0x1]
      %v879 = vlaneseq
      %v880 = vshrl.u32 %v879, 7
      %v881 = vsub.s32 0, %v880
      %v882 = vrot.slane %v877, %v881
      %883 = vset.pattern.permute.xlu0 0
      %884 = vperm.xlu0 %883, %v882
      %v885 = vpop.permute.xlu0 %884
      %v887 = vadd.f32 %v874, %v885
      %v888 = vadd.f32 %v876, %v885
      %v891 = vlaneseq
      %v892 = vand.u32 %v891, 127
      %v893 = vlaneseq
      %v894 = vshrl.u32 %v893, 7
      %v895 = vsub.s32 %v892, %v894
      %v896 = vrot.slane %v887, %v895
      %v897 = vlaneseq
      %v898 = vshrl.u32 %v897, 7
      %v899 = vsub.s32 %v892, %v898
      %v900 = vrot.slane %v888, %v899
      %vm901 = vcmask 1041409
      %v902 = vsel %vm901, %v900, %v896
      %vm904 = vcmask 58368
      %v905 = vsel %vm904, %v902, -inf
      %906 = vmax.xlane.f32.xlu0 %v905
      %v907 = vpop.xlane.xlu0 %906
      %v909 = vlaneseq
      %v910 = vshrl.u32 %v909, 7
      %v911 = vsub.s32 0, %v910
      %v912 = vrot.slane %v907, %v911
      %v913 = vlaneseq
      %v914 = vshrl.u32 %v913, 7
      %v915 = vsub.s32 1, %v914
      %v916 = vrot.slane %v907, %v915
      %v919 = vsub.f32 %v887, %v912
      %v920 = vsub.f32 %v888, %v916
      %v921 = vmul.f32 %v919, 1.442695
      %v922 = vpow.pop %v921
      %v923 = vmul.f32 %v920, 1.442695
      %v924 = vpow.pop %v923
      %927 = vset.pattern.permute.xlu0 0
      %928 = vperm.xlu0 %927, %v922
      %v929 = vpop.permute.xlu0 %928
      %930 = vset.pattern.permute.xlu0 0
      %931 = vperm.xlu0 %930, %v924
      %v932 = vpop.permute.xlu0 %931
      %v933 = vlaneseq
      %v934 = vshrl.u32 %v933, 7
      %v935 = vsub.s32 %v892, %v934
      %v936 = vrot.slane %v929, %v935
      %v937 = vlaneseq
      %v938 = vshrl.u32 %v937, 7
      %v939 = vsub.s32 %v892, %v938
      %v940 = vrot.slane %v932, %v939
      %v941 = vsel %vm901, %v940, %v936
      %v943 = vsel %vm904, %v941, 0.0
      %944 = vadd.xlane.f32.xlu0 %v943
      %v945 = vpop.xlane.xlu0 %944
      %v946 = vrcp.pop %v945
      %v948 = vlaneseq
      %v949 = vshrl.u32 %v948, 7
      %v950 = vsub.s32 0, %v949
      %v951 = vrot.slane %v946, %v950
      %v952 = vlaneseq
      %v953 = vshrl.u32 %v952, 7
      %v954 = vsub.s32 1, %v953
      %v955 = vrot.slane %v946, %v954
      %v958 = vmul.f32 %v922, %v951
      %v959 = vmul.f32 %v924, %v955
      %v960 = vld [vmem:[#allocation9] sm:$0xff]
      %v961 = vld [vmem:[#allocation9 + $0x8] sm:$0xff]
      %963 = vset.pattern.permute.xlu0 0
      %964 = vperm.xlu0 %963, %v958
      %v965 = vpop.permute.xlu0 %964
      %968 = vset.pattern.permute.xlu0 0
      %969 = vperm.xlu0 %968, %v959
      %v970 = vpop.permute.xlu0 %969
      %v972 = vmul.f32 %v965, %v960
      %v973 = vmul.f32 %v970, %v961
      %v974 = vrot.slane %v972, 4
      %v975 = vadd.f32 %v972, %v974
      %v976 = vrot.slane %v975, 2
      %v977 = vadd.f32 %v975, %v976
      %v978 = vrot.slane %v977, 1
      %v979 = vadd.f32 %v977, %v978
      %v980 = vrot.slane %v973, 4
      %v981 = vadd.f32 %v973, %v980
      %v982 = vrot.slane %v981, 2
      %v983 = vadd.f32 %v981, %v982
      %v984 = vrot.slane %v983, 1
      %v985 = vadd.f32 %v983, %v984
      %v989 = vunpack.c.l.s4 1983009808
      %v990 = vunpack.c.0.s8 %v989
      %v991 = vlaneseq
      %v992 = vshrl.u32 %v991, 7
      %v993 = vsub.s32 %v990, %v992
      %v994 = vrot.slane %v979, %v993
      %v996 = vunpack.c.l.s4 1983009808
      %v997 = vunpack.c.0.s8 %v996
      %v998 = vlaneseq
      %v999 = vshrl.u32 %v998, 7
      %v1000 = vsub.s32 %v997, %v999
      %v1001 = vrot.slane %v985, %v1000
      %vm1002 = vcmask 1044484
      %v1003 = vsel %vm1002, %v994, %v994
      %vm1004 = vcmask 1046534
      %v1005 = vsel %vm1004, %v994, %v1003
      %v1006 = vrot.slane %v1001, 7
      %v1007 = vsel %vm901, %v1006, %v1005
      %vm1008 = vcmask 1043459
      %v1009 = vsel %vm1008, %v1006, %v1007
      %vm1010 = vcmask 1045509
      %v1011 = vsel %vm1010, %v1006, %v1009
      %vm1012 = vcmask 1047559
      %v1013 = vsel %vm1012, %v1006, %v1011
      %1015 = vst [vmem:[#allocation2] sm:$0x3] %v1013
      %v1016 = vld [vmem:[#allocation2] sm:$0x3f]
      %v1018 = vcombine.high %v1016, %v1016
      %v1020 = vunpack.c.l.s4 1983009808
      %v1021 = vunpack.c.0.s8 %v1020
      %v1022 = vlaneseq
      %v1023 = vshrl.u32 %v1022, 7
      %v1024 = vsub.s32 %v1021, %v1023
      %v1025 = vrot.slane %v1016, %v1024
      %v1027 = vunpack.c.l.s4 1983009808
      %v1028 = vunpack.c.0.s8 %v1027
      %v1029 = vlaneseq
      %v1030 = vshrl.u32 %v1029, 7
      %v1031 = vsub.s32 %v1028, %v1030
      %v1032 = vrot.slane %v1018, %v1031
      %v1033 = vcombine.high %v1025, %v1025
      %v1037 = vpack.c.bf16 %v1025, %v1025
      %v1038 = vpack.c.bf16 %v1033, %v1033
      %v1039 = vpack.c.bf16 %v1032, %v1032
      %v1040 = vld [vmem:[#allocation15] sm:$0xff]
      %v1041 = vld [vmem:[#allocation15 + $0x8] sm:$0xff]
      %v1042 = vld [vmem:[#allocation15 + $0x10] sm:$0xff]
      %v1043 = vld [vmem:[#allocation15 + $0x18] sm:$0xff]
      %v1044 = vld [vmem:[#allocation15 + $0x20] sm:$0xff]
      %v1045 = vld [vmem:[#allocation15 + $0x28] sm:$0xff]
      %v1046 = vld [vmem:[#allocation15 + $0x30] sm:$0xff]
      %v1047 = vld [vmem:[#allocation15 + $0x38] sm:$0xff]
      %v1048 = vld [vmem:[#allocation15 + $0x40] sm:$0xff]
      %v1049 = vld [vmem:[#allocation15 + $0x48] sm:$0xff]
      %v1050 = vld [vmem:[#allocation15 + $0x50] sm:$0xff]
      %v1051 = vld [vmem:[#allocation15 + $0x58] sm:$0xff]
      %v1052 = vld [vmem:[#allocation15 + $0x60] sm:$0xff]
      %v1053 = vld [vmem:[#allocation15 + $0x68] sm:$0xff]
      %v1054 = vld [vmem:[#allocation15 + $0x70] sm:$0xff]
      %v1055 = vld [vmem:[#allocation15 + $0x78] sm:$0xff]
      %v1056 = vld [vmem:[#allocation15 + $0x80] sm:$0xff]
      %v1057 = vld [vmem:[#allocation15 + $0x88] sm:$0xff]
      %v1058 = vld [vmem:[#allocation15 + $0x90] sm:$0xff]
      %v1059 = vld [vmem:[#allocation15 + $0x98] sm:$0xff]
      %v1060 = vld [vmem:[#allocation15 + $0xa0] sm:$0xff]
      %v1061 = vld [vmem:[#allocation15 + $0xa8] sm:$0xff]
      %v1062 = vld [vmem:[#allocation15 + $0xb0] sm:$0xff]
      %v1063 = vld [vmem:[#allocation15 + $0xb8] sm:$0xff]
      %v1064 = vld [vmem:[#allocation15 + $0xc0] sm:$0xff]
      %v1065 = vld [vmem:[#allocation15 + $0xc8] sm:$0xff]
      %v1066 = vld [vmem:[#allocation15 + $0xd0] sm:$0xff]
      %v1067 = vld [vmem:[#allocation15 + $0xd8] sm:$0xff]
      %v1068 = vld [vmem:[#allocation15 + $0xe0] sm:$0xff]
      %v1069 = vld [vmem:[#allocation15 + $0xe8] sm:$0xff]
      %v1070 = vld [vmem:[#allocation15 + $0xf0] sm:$0xff]
      %v1071 = vld [vmem:[#allocation15 + $0xf8] sm:$0xff]
      %v1072 = vld [vmem:[#allocation15 + $0x100] sm:$0xff]
      %v1073 = vld [vmem:[#allocation15 + $0x108] sm:$0xff]
      %v1074 = vld [vmem:[#allocation15 + $0x110] sm:$0xff]
      %v1075 = vld [vmem:[#allocation15 + $0x118] sm:$0xff]
      %v1076 = vld [vmem:[#allocation15 + $0x120] sm:$0xff]
      %v1077 = vld [vmem:[#allocation15 + $0x128] sm:$0xff]
      %v1078 = vld [vmem:[#allocation15 + $0x130] sm:$0xff]
      %v1079 = vld [vmem:[#allocation15 + $0x138] sm:$0xff]
      %v1080 = vld [vmem:[#allocation15 + $0x140] sm:$0xff]
      %v1081 = vld [vmem:[#allocation15 + $0x148] sm:$0xff]
      %v1082 = vld [vmem:[#allocation15 + $0x150] sm:$0xff]
      %v1083 = vld [vmem:[#allocation15 + $0x158] sm:$0xff]
      %v1084 = vld [vmem:[#allocation15 + $0x160] sm:$0xff]
      %v1085 = vld [vmem:[#allocation15 + $0x168] sm:$0xff]
      %v1086 = vld [vmem:[#allocation15 + $0x170] sm:$0xff]
      %v1087 = vld [vmem:[#allocation15 + $0x178] sm:$0xff]
      %v1088 = vld [vmem:[#allocation15 + $0x180] sm:$0xff]
      %v1089 = vld [vmem:[#allocation15 + $0x188] sm:$0xff]
      %v1090 = vld [vmem:[#allocation15 + $0x190] sm:$0xff]
      %v1091 = vld [vmem:[#allocation15 + $0x198] sm:$0xff]
      %v1092 = vld [vmem:[#allocation15 + $0x1a0] sm:$0xff]
      %v1093 = vld [vmem:[#allocation15 + $0x1a8] sm:$0xff]
      %v1094 = vld [vmem:[#allocation15 + $0x1b0] sm:$0xff]
      %v1095 = vld [vmem:[#allocation15 + $0x1b8] sm:$0xff]
      %v1096 = vld [vmem:[#allocation15 + $0x1c0] sm:$0xff]
      %v1097 = vld [vmem:[#allocation15 + $0x1c8] sm:$0xff]
      %v1098 = vld [vmem:[#allocation15 + $0x1d0] sm:$0xff]
      %v1099 = vld [vmem:[#allocation15 + $0x1d8] sm:$0xff]
      %v1100 = vld [vmem:[#allocation15 + $0x1e0] sm:$0xff]
      %v1101 = vld [vmem:[#allocation15 + $0x1e8] sm:$0xff]
      %v1102 = vld [vmem:[#allocation15 + $0x1f0] sm:$0xff]
      %v1103 = vld [vmem:[#allocation15 + $0x1f8] sm:$0xff]
      %v1104 = vld [vmem:[#allocation15 + $0x200] sm:$0xff]
      %v1105 = vld [vmem:[#allocation15 + $0x208] sm:$0xff]
      %v1106 = vld [vmem:[#allocation15 + $0x210] sm:$0xff]
      %v1107 = vld [vmem:[#allocation15 + $0x218] sm:$0xff]
      %v1108 = vld [vmem:[#allocation15 + $0x220] sm:$0xff]
      %v1109 = vld [vmem:[#allocation15 + $0x228] sm:$0xff]
      %v1110 = vld [vmem:[#allocation15 + $0x230] sm:$0xff]
      %v1111 = vld [vmem:[#allocation15 + $0x238] sm:$0xff]
      %v1112 = vld [vmem:[#allocation15 + $0x240] sm:$0xff]
      %v1113 = vld [vmem:[#allocation15 + $0x248] sm:$0xff]
      %v1114 = vld [vmem:[#allocation15 + $0x250] sm:$0xff]
      %v1115 = vld [vmem:[#allocation15 + $0x258] sm:$0xff]
      %v1116 = vld [vmem:[#allocation15 + $0x260] sm:$0xff]
      %v1117 = vld [vmem:[#allocation15 + $0x268] sm:$0xff]
      %v1118 = vld [vmem:[#allocation15 + $0x270] sm:$0xff]
      %v1119 = vld [vmem:[#allocation15 + $0x278] sm:$0xff]
      %v1120 = vld [vmem:[#allocation15 + $0x280] sm:$0xff]
      %v1121 = vld [vmem:[#allocation15 + $0x288] sm:$0xff]
      %v1122 = vld [vmem:[#allocation15 + $0x290] sm:$0xff]
      %v1123 = vld [vmem:[#allocation15 + $0x298] sm:$0xff]
      %v1124 = vld [vmem:[#allocation15 + $0x2a0] sm:$0xff]
      %v1125 = vld [vmem:[#allocation15 + $0x2a8] sm:$0xff]
      %v1126 = vld [vmem:[#allocation15 + $0x2b0] sm:$0xff]
      %v1127 = vld [vmem:[#allocation15 + $0x2b8] sm:$0xff]
      %v1128 = vld [vmem:[#allocation15 + $0x2c0] sm:$0xff]
      %v1129 = vld [vmem:[#allocation15 + $0x2c8] sm:$0xff]
      %v1130 = vld [vmem:[#allocation15 + $0x2d0] sm:$0xff]
      %v1131 = vld [vmem:[#allocation15 + $0x2d8] sm:$0xff]
      %v1132 = vld [vmem:[#allocation15 + $0x2e0] sm:$0xff]
      %v1133 = vld [vmem:[#allocation15 + $0x2e8] sm:$0xff]
      %v1134 = vld [vmem:[#allocation15 + $0x2f0] sm:$0xff]
      %v1135 = vld [vmem:[#allocation15 + $0x2f8] sm:$0xff]
      %v1136 = vld [vmem:[%s11] sm:$0xf]
      %v1138 = vlaneseq
      %v1139 = vshrl.u32 %v1138, 7
      %v1140 = vsub.s32 0, %v1139
      %v1141 = vrot.slane %v1136, %v1140
      %v1142 = vlaneseq
      %v1143 = vshrl.u32 %v1142, 7
      %v1144 = vsub.s32 1, %v1143
      %v1145 = vrot.slane %v1136, %v1144
      %v1146 = vlaneseq
      %v1147 = vshrl.u32 %v1146, 7
      %v1148 = vsub.s32 2, %v1147
      %v1149 = vrot.slane %v1136, %v1148
      %v1150 = vlaneseq
      %v1151 = vshrl.u32 %v1150, 7
      %v1152 = vsub.s32 3, %v1151
      %v1153 = vrot.slane %v1136, %v1152
      %v1254 = vunpack.c.l.b16 %v1040
      %v1255 = vunpack.c.h.b16 %v1040
      %v1256 = vunpack.c.l.b16 %v1041
      %v1257 = vunpack.c.h.b16 %v1041
      %v1258 = vunpack.c.l.b16 %v1042
      %v1259 = vunpack.c.h.b16 %v1042
      %v1260 = vunpack.c.l.b16 %v1043
      %v1261 = vunpack.c.h.b16 %v1043
      %v1262 = vunpack.c.l.b16 %v1044
      %v1263 = vunpack.c.h.b16 %v1044
      %v1264 = vunpack.c.l.b16 %v1045
      %v1265 = vunpack.c.h.b16 %v1045
      %v1266 = vunpack.c.l.b16 %v1046
      %v1267 = vunpack.c.h.b16 %v1046
      %v1268 = vunpack.c.l.b16 %v1047
      %v1269 = vunpack.c.h.b16 %v1047
      %v1270 = vunpack.c.l.b16 %v1048
      %v1271 = vunpack.c.h.b16 %v1048
      %v1272 = vunpack.c.l.b16 %v1049
      %v1273 = vunpack.c.h.b16 %v1049
      %v1274 = vunpack.c.l.b16 %v1050
      %v1275 = vunpack.c.h.b16 %v1050
      %v1276 = vunpack.c.l.b16 %v1051
      %v1277 = vunpack.c.h.b16 %v1051
      %v1278 = vunpack.c.l.b16 %v1052
      %v1279 = vunpack.c.h.b16 %v1052
      %v1280 = vunpack.c.l.b16 %v1053
      %v1281 = vunpack.c.h.b16 %v1053
      %v1282 = vunpack.c.l.b16 %v1054
      %v1283 = vunpack.c.h.b16 %v1054
      %v1284 = vunpack.c.l.b16 %v1055
      %v1285 = vunpack.c.h.b16 %v1055
      %v1286 = vunpack.c.l.b16 %v1056
      %v1287 = vunpack.c.h.b16 %v1056
      %v1288 = vunpack.c.l.b16 %v1057
      %v1289 = vunpack.c.h.b16 %v1057
      %v1290 = vunpack.c.l.b16 %v1058
      %v1291 = vunpack.c.h.b16 %v1058
      %v1292 = vunpack.c.l.b16 %v1059
      %v1293 = vunpack.c.h.b16 %v1059
      %v1294 = vunpack.c.l.b16 %v1060
      %v1295 = vunpack.c.h.b16 %v1060
      %v1296 = vunpack.c.l.b16 %v1061
      %v1297 = vunpack.c.h.b16 %v1061
      %v1298 = vunpack.c.l.b16 %v1062
      %v1299 = vunpack.c.h.b16 %v1062
      %v1300 = vunpack.c.l.b16 %v1063
      %v1301 = vunpack.c.h.b16 %v1063
      %v1302 = vunpack.c.l.b16 %v1064
      %v1303 = vunpack.c.h.b16 %v1064
      %v1304 = vunpack.c.l.b16 %v1065
      %v1305 = vunpack.c.h.b16 %v1065
      %v1306 = vunpack.c.l.b16 %v1066
      %v1307 = vunpack.c.h.b16 %v1066
      %v1308 = vunpack.c.l.b16 %v1067
      %v1309 = vunpack.c.h.b16 %v1067
      %v1310 = vunpack.c.l.b16 %v1068
      %v1311 = vunpack.c.h.b16 %v1068
      %v1312 = vunpack.c.l.b16 %v1069
      %v1313 = vunpack.c.h.b16 %v1069
      %v1314 = vunpack.c.l.b16 %v1070
      %v1315 = vunpack.c.h.b16 %v1070
      %v1316 = vunpack.c.l.b16 %v1071
      %v1317 = vunpack.c.h.b16 %v1071
      %v1318 = vunpack.c.l.b16 %v1072
      %v1319 = vunpack.c.h.b16 %v1072
      %v1320 = vunpack.c.l.b16 %v1073
      %v1321 = vunpack.c.h.b16 %v1073
      %v1322 = vunpack.c.l.b16 %v1074
      %v1323 = vunpack.c.h.b16 %v1074
      %v1324 = vunpack.c.l.b16 %v1075
      %v1325 = vunpack.c.h.b16 %v1075
      %v1326 = vunpack.c.l.b16 %v1076
      %v1327 = vunpack.c.h.b16 %v1076
      %v1328 = vunpack.c.l.b16 %v1077
      %v1329 = vunpack.c.h.b16 %v1077
      %v1330 = vunpack.c.l.b16 %v1078
      %v1331 = vunpack.c.h.b16 %v1078
      %v1332 = vunpack.c.l.b16 %v1079
      %v1333 = vunpack.c.h.b16 %v1079
      %v1334 = vunpack.c.l.b16 %v1080
      %v1335 = vunpack.c.h.b16 %v1080
      %v1336 = vunpack.c.l.b16 %v1081
      %v1337 = vunpack.c.h.b16 %v1081
      %v1338 = vunpack.c.l.b16 %v1082
      %v1339 = vunpack.c.h.b16 %v1082
      %v1340 = vunpack.c.l.b16 %v1083
      %v1341 = vunpack.c.h.b16 %v1083
      %v1342 = vunpack.c.l.b16 %v1084
      %v1343 = vunpack.c.h.b16 %v1084
      %v1344 = vunpack.c.l.b16 %v1085
      %v1345 = vunpack.c.h.b16 %v1085
      %v1346 = vunpack.c.l.b16 %v1086
      %v1347 = vunpack.c.h.b16 %v1086
      %v1348 = vunpack.c.l.b16 %v1087
      %v1349 = vunpack.c.h.b16 %v1087
      %v1350 = vunpack.c.l.b16 %v1088
      %v1351 = vunpack.c.h.b16 %v1088
      %v1352 = vunpack.c.l.b16 %v1089
      %v1353 = vunpack.c.h.b16 %v1089
      %v1354 = vunpack.c.l.b16 %v1090
      %v1355 = vunpack.c.h.b16 %v1090
      %v1356 = vunpack.c.l.b16 %v1091
      %v1357 = vunpack.c.h.b16 %v1091
      %v1358 = vunpack.c.l.b16 %v1092
      %v1359 = vunpack.c.h.b16 %v1092
      %v1360 = vunpack.c.l.b16 %v1093
      %v1361 = vunpack.c.h.b16 %v1093
      %v1362 = vunpack.c.l.b16 %v1094
      %v1363 = vunpack.c.h.b16 %v1094
      %v1364 = vunpack.c.l.b16 %v1095
      %v1365 = vunpack.c.h.b16 %v1095
      %v1366 = vunpack.c.l.b16 %v1096
      %v1367 = vunpack.c.h.b16 %v1096
      %v1368 = vunpack.c.l.b16 %v1097
      %v1369 = vunpack.c.h.b16 %v1097
      %v1370 = vunpack.c.l.b16 %v1098
      %v1371 = vunpack.c.h.b16 %v1098
      %v1372 = vunpack.c.l.b16 %v1099
      %v1373 = vunpack.c.h.b16 %v1099
      %v1374 = vunpack.c.l.b16 %v1100
      %v1375 = vunpack.c.h.b16 %v1100
      %v1376 = vunpack.c.l.b16 %v1101
      %v1377 = vunpack.c.h.b16 %v1101
      %v1378 = vunpack.c.l.b16 %v1102
      %v1379 = vunpack.c.h.b16 %v1102
      %v1380 = vunpack.c.l.b16 %v1103
      %v1381 = vunpack.c.h.b16 %v1103
      %v1382 = vunpack.c.l.b16 %v1104
      %v1383 = vunpack.c.h.b16 %v1104
      %v1384 = vunpack.c.l.b16 %v1105
      %v1385 = vunpack.c.h.b16 %v1105
      %v1386 = vunpack.c.l.b16 %v1106
      %v1387 = vunpack.c.h.b16 %v1106
      %v1388 = vunpack.c.l.b16 %v1107
      %v1389 = vunpack.c.h.b16 %v1107
      %v1390 = vunpack.c.l.b16 %v1108
      %v1391 = vunpack.c.h.b16 %v1108
      %v1392 = vunpack.c.l.b16 %v1109
      %v1393 = vunpack.c.h.b16 %v1109
      %v1394 = vunpack.c.l.b16 %v1110
      %v1395 = vunpack.c.h.b16 %v1110
      %v1396 = vunpack.c.l.b16 %v1111
      %v1397 = vunpack.c.h.b16 %v1111
      %v1398 = vunpack.c.l.b16 %v1112
      %v1399 = vunpack.c.h.b16 %v1112
      %v1400 = vunpack.c.l.b16 %v1113
      %v1401 = vunpack.c.h.b16 %v1113
      %v1402 = vunpack.c.l.b16 %v1114
      %v1403 = vunpack.c.h.b16 %v1114
      %v1404 = vunpack.c.l.b16 %v1115
      %v1405 = vunpack.c.h.b16 %v1115
      %v1406 = vunpack.c.l.b16 %v1116
      %v1407 = vunpack.c.h.b16 %v1116
      %v1408 = vunpack.c.l.b16 %v1117
      %v1409 = vunpack.c.h.b16 %v1117
      %v1410 = vunpack.c.l.b16 %v1118
      %v1411 = vunpack.c.h.b16 %v1118
      %v1412 = vunpack.c.l.b16 %v1119
      %v1413 = vunpack.c.h.b16 %v1119
      %v1414 = vunpack.c.l.b16 %v1120
      %v1415 = vunpack.c.h.b16 %v1120
      %v1416 = vunpack.c.l.b16 %v1121
      %v1417 = vunpack.c.h.b16 %v1121
      %v1418 = vunpack.c.l.b16 %v1122
      %v1419 = vunpack.c.h.b16 %v1122
      %v1420 = vunpack.c.l.b16 %v1123
      %v1421 = vunpack.c.h.b16 %v1123
      %v1422 = vunpack.c.l.b16 %v1124
      %v1423 = vunpack.c.h.b16 %v1124
      %v1424 = vunpack.c.l.b16 %v1125
      %v1425 = vunpack.c.h.b16 %v1125
      %v1426 = vunpack.c.l.b16 %v1126
      %v1427 = vunpack.c.h.b16 %v1126
      %v1428 = vunpack.c.l.b16 %v1127
      %v1429 = vunpack.c.h.b16 %v1127
      %v1430 = vunpack.c.l.b16 %v1128
      %v1431 = vunpack.c.h.b16 %v1128
      %v1432 = vunpack.c.l.b16 %v1129
      %v1433 = vunpack.c.h.b16 %v1129
      %v1434 = vunpack.c.l.b16 %v1130
      %v1435 = vunpack.c.h.b16 %v1130
      %v1436 = vunpack.c.l.b16 %v1131
      %v1437 = vunpack.c.h.b16 %v1131
      %v1438 = vunpack.c.l.b16 %v1132
      %v1439 = vunpack.c.h.b16 %v1132
      %v1440 = vunpack.c.l.b16 %v1133
      %v1441 = vunpack.c.h.b16 %v1133
      %v1442 = vunpack.c.l.b16 %v1134
      %v1443 = vunpack.c.h.b16 %v1134
      %v1444 = vunpack.c.l.b16 %v1135
      %v1445 = vunpack.c.h.b16 %v1135
      %v1446 = vpack.c.b16 %v1258, %v1254
      %v1447 = vpack.c.b16 %v1259, %v1255
      %v1448 = vpack.c.b16 %v1260, %v1256
      %v1449 = vpack.c.b16 %v1261, %v1257
      %v1450 = vpack.c.b16 %v1266, %v1262
      %v1451 = vpack.c.b16 %v1267, %v1263
      %v1452 = vpack.c.b16 %v1268, %v1264
      %v1453 = vpack.c.b16 %v1269, %v1265
      %v1454 = vpack.c.b16 %v1274, %v1270
      %v1455 = vpack.c.b16 %v1275, %v1271
      %v1456 = vpack.c.b16 %v1276, %v1272
      %v1457 = vpack.c.b16 %v1277, %v1273
      %v1458 = vpack.c.b16 %v1282, %v1278
      %v1459 = vpack.c.b16 %v1283, %v1279
      %v1460 = vpack.c.b16 %v1284, %v1280
      %v1461 = vpack.c.b16 %v1285, %v1281
      %v1462 = vpack.c.b16 %v1290, %v1286
      %v1463 = vpack.c.b16 %v1291, %v1287
      %v1464 = vpack.c.b16 %v1292, %v1288
      %v1465 = vpack.c.b16 %v1293, %v1289
      %v1466 = vpack.c.b16 %v1298, %v1294
      %v1467 = vpack.c.b16 %v1299, %v1295
      %v1468 = vpack.c.b16 %v1300, %v1296
      %v1469 = vpack.c.b16 %v1301, %v1297
      %v1470 = vpack.c.b16 %v1306, %v1302
      %v1471 = vpack.c.b16 %v1307, %v1303
      %v1472 = vpack.c.b16 %v1308, %v1304
      %v1473 = vpack.c.b16 %v1309, %v1305
      %v1474 = vpack.c.b16 %v1314, %v1310
      %v1475 = vpack.c.b16 %v1315, %v1311
      %v1476 = vpack.c.b16 %v1316, %v1312
      %v1477 = vpack.c.b16 %v1317, %v1313
      %v1478 = vpack.c.b16 %v1322, %v1318
      %v1479 = vpack.c.b16 %v1323, %v1319
      %v1480 = vpack.c.b16 %v1324, %v1320
      %v1481 = vpack.c.b16 %v1325, %v1321
      %v1482 = vpack.c.b16 %v1330, %v1326
      %v1483 = vpack.c.b16 %v1331, %v1327
      %v1484 = vpack.c.b16 %v1332, %v1328
      %v1485 = vpack.c.b16 %v1333, %v1329
      %v1486 = vpack.c.b16 %v1338, %v1334
      %v1487 = vpack.c.b16 %v1339, %v1335
      %v1488 = vpack.c.b16 %v1340, %v1336
      %v1489 = vpack.c.b16 %v1341, %v1337
      %v1490 = vpack.c.b16 %v1346, %v1342
      %v1491 = vpack.c.b16 %v1347, %v1343
      %v1492 = vpack.c.b16 %v1348, %v1344
      %v1493 = vpack.c.b16 %v1349, %v1345
      %v1494 = vpack.c.b16 %v1354, %v1350
      %v1495 = vpack.c.b16 %v1355, %v1351
      %v1496 = vpack.c.b16 %v1356, %v1352
      %v1497 = vpack.c.b16 %v1357, %v1353
      %v1498 = vpack.c.b16 %v1362, %v1358
      %v1499 = vpack.c.b16 %v1363, %v1359
      %v1500 = vpack.c.b16 %v1364, %v1360
      %v1501 = vpack.c.b16 %v1365, %v1361
      %v1502 = vpack.c.b16 %v1370, %v1366
      %v1503 = vpack.c.b16 %v1371, %v1367
      %v1504 = vpack.c.b16 %v1372, %v1368
      %v1505 = vpack.c.b16 %v1373, %v1369
      %v1506 = vpack.c.b16 %v1378, %v1374
      %v1507 = vpack.c.b16 %v1379, %v1375
      %v1508 = vpack.c.b16 %v1380, %v1376
      %v1509 = vpack.c.b16 %v1381, %v1377
      %v1510 = vpack.c.b16 %v1386, %v1382
      %v1511 = vpack.c.b16 %v1387, %v1383
      %v1512 = vpack.c.b16 %v1388, %v1384
      %v1513 = vpack.c.b16 %v1389, %v1385
      %v1514 = vpack.c.b16 %v1394, %v1390
      %v1515 = vpack.c.b16 %v1395, %v1391
      %v1516 = vpack.c.b16 %v1396, %v1392
      %v1517 = vpack.c.b16 %v1397, %v1393
      %v1518 = vpack.c.b16 %v1402, %v1398
      %v1519 = vpack.c.b16 %v1403, %v1399
      %v1520 = vpack.c.b16 %v1404, %v1400
      %v1521 = vpack.c.b16 %v1405, %v1401
      %v1522 = vpack.c.b16 %v1410, %v1406
      %v1523 = vpack.c.b16 %v1411, %v1407
      %v1524 = vpack.c.b16 %v1412, %v1408
      %v1525 = vpack.c.b16 %v1413, %v1409
      %v1526 = vpack.c.b16 %v1418, %v1414
      %v1527 = vpack.c.b16 %v1419, %v1415
      %v1528 = vpack.c.b16 %v1420, %v1416
      %v1529 = vpack.c.b16 %v1421, %v1417
      %v1530 = vpack.c.b16 %v1426, %v1422
      %v1531 = vpack.c.b16 %v1427, %v1423
      %v1532 = vpack.c.b16 %v1428, %v1424
      %v1533 = vpack.c.b16 %v1429, %v1425
      %v1534 = vpack.c.b16 %v1434, %v1430
      %v1535 = vpack.c.b16 %v1435, %v1431
      %v1536 = vpack.c.b16 %v1436, %v1432
      %v1537 = vpack.c.b16 %v1437, %v1433
      %v1538 = vpack.c.b16 %v1442, %v1438
      %v1539 = vpack.c.b16 %v1443, %v1439
      %v1540 = vpack.c.b16 %v1444, %v1440
      %v1541 = vpack.c.b16 %v1445, %v1441
      %1638 = vmatprep.subr.bf16.mxu0 %v1447
      %1639 = vmatpush1.bf16.msra.mxu0 %v1446
      %1640 = vmatprep.subr.bf16.mxu0 %v1451
      %1641 = vmatpush1.bf16.msra.mxu0 %v1450
      %1642 = vmatprep.subr.bf16.mxu0 %v1455
      %1643 = vmatpush1.bf16.msra.mxu0 %v1454
      %1644 = vmatprep.subr.bf16.mxu0 %v1459
      %1645 = vmatpush1.bf16.msra.mxu0 %v1458
      %1646 = vmatprep.subr.bf16.mxu0 %v1463
      %1647 = vmatpush1.bf16.msra.mxu0 %v1462
      %1648 = vmatprep.subr.bf16.mxu0 %v1467
      %1649 = vmatpush1.bf16.msra.mxu0 %v1466
      %1650 = vmatprep.subr.bf16.mxu0 %v1471
      %1651 = vmatpush1.bf16.msra.mxu0 %v1470
      %1652 = vmatprep.subr.bf16.mxu0 %v1475
      %1653 = vmatpush1.bf16.msra.mxu0 %v1474
      %1654 = vmatprep.subr.bf16.mxu0 %v1479
      %1655 = vmatpush1.bf16.msra.mxu0 %v1478
      %1656 = vmatprep.subr.bf16.mxu0 %v1483
      %1657 = vmatpush1.bf16.msra.mxu0 %v1482
      %1658 = vmatprep.subr.bf16.mxu0 %v1487
      %1659 = vmatpush1.bf16.msra.mxu0 %v1486
      %1660 = vmatprep.subr.bf16.mxu0 %v1491
      %1661 = vmatpush1.bf16.msra.mxu0 %v1490
      %1662 = vmatprep.subr.bf16.mxu0 %v1495
      %1663 = vmatpush1.bf16.msra.mxu0 %v1494
      %1664 = vmatprep.subr.bf16.mxu0 %v1499
      %1665 = vmatpush1.bf16.msra.mxu0 %v1498
      %1666 = vmatprep.subr.bf16.mxu0 %v1503
      %1667 = vmatpush1.bf16.msra.mxu0 %v1502
      %1668 = vmatprep.subr.bf16.mxu0 %v1507
      %1669 = vmatpush1.bf16.msra.mxu0 %v1506
      %1670 = vmatprep.mubr.bf16.mxu0 %v1038
      %1671 = vmatmul.mubr.bf16.gmra.mrb[0].mxu0 %v1037
      %v1672 = vpop.f32.mrb[0].mxu0
      %v1673 = vadd.f32 %v1141, %v1672
      %v1674 = vpop.f32.mrb[0].mxu0
      %v1675 = vadd.f32 %v1145, %v1674
      %v1676 = vpop.f32.mrb[0].mxu0
      %v1677 = vpop.f32.mrb[0].mxu0
      %1678 = vdwg.mxu0
      %1679 = vmatprep.subr.bf16.mxu0 %v1511
      %1680 = vmatpush1.bf16.msra.mxu0 %v1510
      %1681 = vmatprep.subr.bf16.mxu0 %v1515
      %1682 = vmatpush1.bf16.msra.mxu0 %v1514
      %1683 = vmatprep.subr.bf16.mxu0 %v1519
      %1684 = vmatpush1.bf16.msra.mxu0 %v1518
      %1685 = vmatprep.subr.bf16.mxu0 %v1523
      %1686 = vmatpush1.bf16.msra.mxu0 %v1522
      %1687 = vmatprep.subr.bf16.mxu0 %v1527
      %1688 = vmatpush1.bf16.msra.mxu0 %v1526
      %1689 = vmatprep.subr.bf16.mxu0 %v1531
      %1690 = vmatpush1.bf16.msra.mxu0 %v1530
      %1691 = vmatprep.subr.bf16.mxu0 %v1535
      %1692 = vmatpush1.bf16.msra.mxu0 %v1534
      %1693 = vmatprep.subr.bf16.mxu0 %v1539
      %1694 = vmatpush1.bf16.msra.mxu0 %v1538
      %1695 = vmatprep.subr.bf16.mxu0 0
      %1696 = vmatpush1.bf16.msra.mxu0 0
      %1697 = vmatprep.subr.bf16.mxu0 0
      %1698 = vmatpush1.bf16.msra.mxu0 0
      %1699 = vmatprep.subr.bf16.mxu0 0
      %1700 = vmatpush1.bf16.msra.mxu0 0
      %1701 = vmatprep.subr.bf16.mxu0 0
      %1702 = vmatpush1.bf16.msra.mxu0 0
      %1703 = vmatprep.subr.bf16.mxu0 0
      %1704 = vmatpush1.bf16.msra.mxu0 0
      %1705 = vmatprep.subr.bf16.mxu0 0
      %1706 = vmatpush1.bf16.msra.mxu0 0
      %1707 = vmatprep.subr.bf16.mxu0 0
      %1708 = vmatpush1.bf16.msra.mxu0 0
      %1709 = vmatprep.subr.bf16.mxu0 0
      %1710 = vmatpush1.bf16.msra.mxu0 0
      %1711 = vmatprep.mubr.bf16.mxu0 0
      %1712 = vmatmul.mubr.bf16.gmra.mrb[0].mxu0 %v1039
      %v1713 = vpop.f32.mrb[0].mxu0
      %v1714 = vadd.f32 %v1673, %v1713
      %v1715 = vpop.f32.mrb[0].mxu0
      %v1716 = vadd.f32 %v1675, %v1715
      %v1717 = vpop.f32.mrb[0].mxu0
      %v1718 = vpop.f32.mrb[0].mxu0
      %1719 = vdwg.mxu0
      %1720 = vmatprep.subr.bf16.mxu0 %v1449
      %1721 = vmatpush1.bf16.msra.mxu0 %v1448
      %1722 = vmatprep.subr.bf16.mxu0 %v1453
      %1723 = vmatpush1.bf16.msra.mxu0 %v1452
      %1724 = vmatprep.subr.bf16.mxu0 %v1457
      %1725 = vmatpush1.bf16.msra.mxu0 %v1456
      %1726 = vmatprep.subr.bf16.mxu0 %v1461
      %1727 = vmatpush1.bf16.msra.mxu0 %v1460
      %1728 = vmatprep.subr.bf16.mxu0 %v1465
      %1729 = vmatpush1.bf16.msra.mxu0 %v1464
      %1730 = vmatprep.subr.bf16.mxu0 %v1469
      %1731 = vmatpush1.bf16.msra.mxu0 %v1468
      %1732 = vmatprep.subr.bf16.mxu0 %v1473
      %1733 = vmatpush1.bf16.msra.mxu0 %v1472
      %1734 = vmatprep.subr.bf16.mxu0 %v1477
      %1735 = vmatpush1.bf16.msra.mxu0 %v1476
      %1736 = vmatprep.subr.bf16.mxu0 %v1481
      %1737 = vmatpush1.bf16.msra.mxu0 %v1480
      %1738 = vmatprep.subr.bf16.mxu0 %v1485
      %1739 = vmatpush1.bf16.msra.mxu0 %v1484
      %1740 = vmatprep.subr.bf16.mxu0 %v1489
      %1741 = vmatpush1.bf16.msra.mxu0 %v1488
      %1742 = vmatprep.subr.bf16.mxu0 %v1493
      %1743 = vmatpush1.bf16.msra.mxu0 %v1492
      %1744 = vmatprep.subr.bf16.mxu0 %v1497
      %1745 = vmatpush1.bf16.msra.mxu0 %v1496
      %1746 = vmatprep.subr.bf16.mxu0 %v1501
      %1747 = vmatpush1.bf16.msra.mxu0 %v1500
      %1748 = vmatprep.subr.bf16.mxu0 %v1505
      %1749 = vmatpush1.bf16.msra.mxu0 %v1504
      %1750 = vmatprep.subr.bf16.mxu0 %v1509
      %1751 = vmatpush1.bf16.msra.mxu0 %v1508
      %1752 = vmatprep.mubr.bf16.mxu0 %v1038
      %1753 = vmatmul.mubr.bf16.gmra.mrb[0].mxu0 %v1037
      %v1754 = vpop.f32.mrb[0].mxu0
      %v1755 = vadd.f32 %v1149, %v1754
      %v1756 = vpop.f32.mrb[0].mxu0
      %v1757 = vadd.f32 %v1153, %v1756
      %v1758 = vpop.f32.mrb[0].mxu0
      %v1759 = vpop.f32.mrb[0].mxu0
      %1760 = vdwg.mxu0
      %1761 = vmatprep.subr.bf16.mxu0 %v1513
      %1762 = vmatpush1.bf16.msra.mxu0 %v1512
      %1763 = vmatprep.subr.bf16.mxu0 %v1517
      %1764 = vmatpush1.bf16.msra.mxu0 %v1516
      %1765 = vmatprep.subr.bf16.mxu0 %v1521
      %1766 = vmatpush1.bf16.msra.mxu0 %v1520
      %1767 = vmatprep.subr.bf16.mxu0 %v1525
      %1768 = vmatpush1.bf16.msra.mxu0 %v1524
      %1769 = vmatprep.subr.bf16.mxu0 %v1529
      %1770 = vmatpush1.bf16.msra.mxu0 %v1528
      %1771 = vmatprep.subr.bf16.mxu0 %v1533
      %1772 = vmatpush1.bf16.msra.mxu0 %v1532
      %1773 = vmatprep.subr.bf16.mxu0 %v1537
      %1774 = vmatpush1.bf16.msra.mxu0 %v1536
      %1775 = vmatprep.subr.bf16.mxu0 %v1541
      %1776 = vmatpush1.bf16.msra.mxu0 %v1540
      %1777 = vmatprep.subr.bf16.mxu0 0
      %1778 = vmatpush1.bf16.msra.mxu0 0
      %1779 = vmatprep.subr.bf16.mxu0 0
      %1780 = vmatpush1.bf16.msra.mxu0 0
      %1781 = vmatprep.subr.bf16.mxu0 0
      %1782 = vmatpush1.bf16.msra.mxu0 0
      %1783 = vmatprep.subr.bf16.mxu0 0
      %1784 = vmatpush1.bf16.msra.mxu0 0
      %1785 = vmatprep.subr.bf16.mxu0 0
      %1786 = vmatpush1.bf16.msra.mxu0 0
      %1787 = vmatprep.subr.bf16.mxu0 0
      %1788 = vmatpush1.bf16.msra.mxu0 0
      %1789 = vmatprep.subr.bf16.mxu0 0
      %1790 = vmatpush1.bf16.msra.mxu0 0
      %1791 = vmatprep.subr.bf16.mxu0 0
      %1792 = vmatpush1.bf16.msra.mxu0 0
      %1793 = vmatprep.mubr.bf16.mxu0 0
      %1794 = vmatmul.mubr.bf16.gmra.mrb[0].mxu0 %v1039
      %v1795 = vpop.f32.mrb[0].mxu0
      %v1796 = vadd.f32 %v1755, %v1795
      %v1797 = vpop.f32.mrb[0].mxu0
      %v1798 = vadd.f32 %v1757, %v1797
      %v1799 = vpop.f32.mrb[0].mxu0
      %v1800 = vpop.f32.mrb[0].mxu0
      %1801 = vdwg.mxu0
      %v1802 = vmul.f32 %v1714, 0.5
      %v1803 = vtanh.pop %v1802
      %v1804 = vadd.f32 %v1803, 1.0
      %v1805 = vmul.f32 %v1804, 0.5
      %v1806 = vmul.f32 %v1716, 0.5
      %v1807 = vtanh.pop %v1806
      %v1808 = vadd.f32 %v1807, 1.0
      %v1809 = vmul.f32 %v1808, 0.5
      %v1810 = vtanh.pop %v1796
      %v1811 = vmul.f32 %v1798, 0.5
      %v1812 = vtanh.pop %v1811
      %v1813 = vadd.f32 %v1812, 1.0
      %v1814 = vmul.f32 %v1813, 0.5
      %v1815 = vmul.f32 %v1809, %v163
      %v1816 = vmul.f32 %v1805, %v1810
      %v1817 = vadd.f32 %v1815, %v1816
      %v1818 = vtanh.pop %v1817
      %v1819 = vmul.f32 %v1814, %v1818
      %1820 = vst [vmem:[#allocation2 + $0x4] sm:$0x3] %v1819
      %1821 = vst [vmem:[#allocation4] sm:$0x3] %v1817
      %v1822 = vmul.f32 %v1819, %v161
      %v1823 = vpack.c.bf16 %v1822, %v1822
      %v1824 = vld [vmem:[#allocation17] sm:$0xff]
      %v1825 = vld [vmem:[#allocation17 + $0x8] sm:$0xff]
      %v1826 = vld [vmem:[#allocation17 + $0x10] sm:$0xff]
      %v1827 = vld [vmem:[#allocation17 + $0x18] sm:$0xff]
      %v1828 = vld [vmem:[#allocation17 + $0x20] sm:$0xff]
      %v1829 = vld [vmem:[#allocation17 + $0x28] sm:$0xff]
      %v1830 = vld [vmem:[#allocation17 + $0x30] sm:$0xff]
      %v1831 = vld [vmem:[#allocation17 + $0x38] sm:$0xff]
      %v1832 = vld [vmem:[#allocation17 + $0x40] sm:$0xff]
      %v1833 = vld [vmem:[#allocation17 + $0x48] sm:$0xff]
      %v1834 = vld [vmem:[#allocation17 + $0x50] sm:$0xff]
      %v1835 = vld [vmem:[#allocation17 + $0x58] sm:$0xff]
      %v1836 = vld [vmem:[#allocation17 + $0x60] sm:$0xff]
      %v1837 = vld [vmem:[#allocation17 + $0x68] sm:$0xff]
      %v1838 = vld [vmem:[#allocation17 + $0x70] sm:$0xff]
      %v1839 = vld [vmem:[#allocation17 + $0x78] sm:$0xff]
      %v1840 = vld [vmem:[%s13] sm:$0x3]
      %v1842 = vlaneseq
      %v1843 = vshrl.u32 %v1842, 7
      %v1844 = vsub.s32 0, %v1843
      %v1845 = vrot.slane %v1840, %v1844
      %v1846 = vlaneseq
      %v1847 = vshrl.u32 %v1846, 7
      %v1848 = vsub.s32 1, %v1847
      %v1849 = vrot.slane %v1840, %v1848
      %v1868 = vunpack.c.l.b16 %v1824
      %v1869 = vunpack.c.h.b16 %v1824
      %v1870 = vunpack.c.l.b16 %v1825
      %v1871 = vunpack.c.h.b16 %v1825
      %v1872 = vunpack.c.l.b16 %v1826
      %v1873 = vunpack.c.h.b16 %v1826
      %v1874 = vunpack.c.l.b16 %v1827
      %v1875 = vunpack.c.h.b16 %v1827
      %v1876 = vunpack.c.l.b16 %v1828
      %v1877 = vunpack.c.h.b16 %v1828
      %v1878 = vunpack.c.l.b16 %v1829
      %v1879 = vunpack.c.h.b16 %v1829
      %v1880 = vunpack.c.l.b16 %v1830
      %v1881 = vunpack.c.h.b16 %v1830
      %v1882 = vunpack.c.l.b16 %v1831
      %v1883 = vunpack.c.h.b16 %v1831
      %v1884 = vunpack.c.l.b16 %v1832
      %v1885 = vunpack.c.h.b16 %v1832
      %v1886 = vunpack.c.l.b16 %v1833
      %v1887 = vunpack.c.h.b16 %v1833
      %v1888 = vunpack.c.l.b16 %v1834
      %v1889 = vunpack.c.h.b16 %v1834
      %v1890 = vunpack.c.l.b16 %v1835
      %v1891 = vunpack.c.h.b16 %v1835
      %v1892 = vunpack.c.l.b16 %v1836
      %v1893 = vunpack.c.h.b16 %v1836
      %v1894 = vunpack.c.l.b16 %v1837
      %v1895 = vunpack.c.h.b16 %v1837
      %v1896 = vunpack.c.l.b16 %v1838
      %v1897 = vunpack.c.h.b16 %v1838
      %v1898 = vunpack.c.l.b16 %v1839
      %v1899 = vunpack.c.h.b16 %v1839
      %v1900 = vpack.c.b16 %v1870, %v1868
      %v1901 = vpack.c.b16 %v1871, %v1869
      %v1902 = vpack.c.b16 %v1874, %v1872
      %v1903 = vpack.c.b16 %v1875, %v1873
      %v1904 = vpack.c.b16 %v1878, %v1876
      %v1905 = vpack.c.b16 %v1879, %v1877
      %v1906 = vpack.c.b16 %v1882, %v1880
      %v1907 = vpack.c.b16 %v1883, %v1881
      %v1908 = vpack.c.b16 %v1886, %v1884
      %v1909 = vpack.c.b16 %v1887, %v1885
      %v1910 = vpack.c.b16 %v1890, %v1888
      %v1911 = vpack.c.b16 %v1891, %v1889
      %v1912 = vpack.c.b16 %v1894, %v1892
      %v1913 = vpack.c.b16 %v1895, %v1893
      %v1914 = vpack.c.b16 %v1898, %v1896
      %v1915 = vpack.c.b16 %v1899, %v1897
      %1932 = vmatprep.subr.bf16.mxu0 %v1901
      %1933 = vmatpush1.bf16.msra.mxu0 %v1900
      %1934 = vmatprep.subr.bf16.mxu0 %v1903
      %1935 = vmatpush1.bf16.msra.mxu0 %v1902
      %1936 = vmatprep.subr.bf16.mxu0 %v1905
      %1937 = vmatpush1.bf16.msra.mxu0 %v1904
      %1938 = vmatprep.subr.bf16.mxu0 %v1907
      %1939 = vmatpush1.bf16.msra.mxu0 %v1906
      %1940 = vmatprep.subr.bf16.mxu0 %v1909
      %1941 = vmatpush1.bf16.msra.mxu0 %v1908
      %1942 = vmatprep.subr.bf16.mxu0 %v1911
      %1943 = vmatpush1.bf16.msra.mxu0 %v1910
      %1944 = vmatprep.subr.bf16.mxu0 %v1913
      %1945 = vmatpush1.bf16.msra.mxu0 %v1912
      %1946 = vmatprep.subr.bf16.mxu0 %v1915
      %1947 = vmatpush1.bf16.msra.mxu0 %v1914
      %1948 = vmatprep.subr.bf16.mxu0 0
      %1949 = vmatpush1.bf16.msra.mxu0 0
      %1950 = vmatprep.subr.bf16.mxu0 0
      %1951 = vmatpush1.bf16.msra.mxu0 0
      %1952 = vmatprep.subr.bf16.mxu0 0
      %1953 = vmatpush1.bf16.msra.mxu0 0
      %1954 = vmatprep.subr.bf16.mxu0 0
      %1955 = vmatpush1.bf16.msra.mxu0 0
      %1956 = vmatprep.subr.bf16.mxu0 0
      %1957 = vmatpush1.bf16.msra.mxu0 0
      %1958 = vmatprep.subr.bf16.mxu0 0
      %1959 = vmatpush1.bf16.msra.mxu0 0
      %1960 = vmatprep.subr.bf16.mxu0 0
      %1961 = vmatpush1.bf16.msra.mxu0 0
      %1962 = vmatprep.subr.bf16.mxu0 0
      %1963 = vmatpush1.bf16.msra.mxu0 0
      %1964 = vmatprep.mubr.bf16.mxu0 0
      %1965 = vmatmul.mubr.bf16.gmra.mrb[0].mxu0 %v1823
      %v1966 = vpop.f32.mrb[0].mxu0
      %v1967 = vadd.f32 %v1845, %v1966
      %v1968 = vpop.f32.mrb[0].mxu0
      %v1969 = vadd.f32 %v1849, %v1968
      %v1970 = vpop.f32.mrb[0].mxu0
      %v1971 = vpop.f32.mrb[0].mxu0
      %1972 = vdwg.mxu0
      %v1975 = vcombine.low %v1967, %v1969
      %v1977 = vunpack.c.l.s4 1983009808
      %v1978 = vunpack.c.0.s8 %v1977
      %v1979 = vlaneseq
      %v1980 = vshrl.u32 %v1979, 7
      %v1981 = vsub.s32 %v1978, %v1980
      %v1982 = vrot.slane %v1975, %v1981
      %s1984 = smul.u32 %s150, 2
      %s1985 = smul.addr %s1984, 2
      %s1986 = scalar_lea.vmem [#allocation18], %s1985
      %1987 = vst [vmem:[%s1986] sm:$0xf] %v1982
    $region90: #{tpu_custom_call.1} parent=1 // loop_footer
      %s154 = sadd.s32 1, %s150
    $region91: #{tpu_custom_call.1} parent=1 // loop_footer_branch
      %149 = sbr.rel target = $region87
    $region92: #{tpu_custom_call.1} parent=1 // loop_exit
      _
    // Predicated region
    $region93: #{tpu_custom_call.1} parent=1 // pred_check
      _
    $region94: #{tpu_custom_call.1} parent=1 // pred_check_branch
      %1989 = sbr.rel (0) target = $region96
    $region95: #{tpu_custom_call.1} parent=1 // pred_region
      %s1991 = ssub.s32 384, 384
      %1992 = vsyncadd [#allocation8], %s1991
      %s1993 = sshll.u32 [#allocation18], 4
      %s1994 = int_to_ptr.vmem [resolvable:$true] %s1993
      %1999 = dma.vmem_to_hbm [thread:$0]  %s1994, 384, %s14, [#allocation8], 64, 64, 4
    $region96: #{tpu_custom_call.1} parent=1 // pred_fallthru
      _
    // Predicated region
    $region97: #{tpu_custom_call.1} parent=1 // pred_check
      _
    $region98: #{tpu_custom_call.1} parent=1 // pred_check_branch
      %2001 = sbr.rel (0) target = $region100
    $region99: #{tpu_custom_call.1} parent=1 // pred_region
      %2002 = dma.done [#allocation8], 384
    $region100: #{tpu_custom_call.1} parent=1 // pred_fallthru
      _
    %2003 = vsyncpa [#allocation7], 1
    %2004 = vsyncpa [#allocation10], 1
    %2005 = vsyncpa [#allocation13], 1
    %2006 = vsyncpa [#allocation16], 1
    %2007 = vsyncpa [#allocation8], 1

</llo_original>
